<compile_context>
chip_gen: v7x
topology: tpu7x:2x2x1
jax: 0.10.0
libtpu: 0.0.40
codegen_flags: <defaults>
</compile_context>

<pallas_src>
import functools
import math
import operator

import jax
import jax.numpy as jnp
from jax.experimental import pallas as pl
from jax.experimental.pallas import tpu as pltpu

_MAX_BLOCK_BYTES = 4 * 1024 * 1024        # per-input block cap (v7x-friendly)
_VMEM_BUDGET_BYTES = 40 * 1024 * 1024     # (n_inputs+1) x 2 x block must fit here
_VMEM_SLACK_BYTES = 8 * 1024 * 1024       # headroom for Mosaic internal scratch
_SMALL_FAST_PATH_ELEMS = 256 * 1024       # below ~1 MiB/input (f32) XLA fusion wins


def _cdiv(a, b):
    return (a + b - 1) // b


def _round_up(x, m):
    return ((x + m - 1) // m) * m


def _sublane_granularity(dtype):
    """Sublane packing granularity: 8 for 32-bit, 16 for bf16, 32 for int8/fp8."""
    itemsize = jnp.dtype(dtype).itemsize
    return max(8, (8 * 4) // max(1, itemsize))


def _cores_per_chip():
    """Best-effort TensorCore count per chip (2 on v7x, else 1)."""
    try:
        dev = jax.devices()[0]
        n = getattr(dev, "num_cores", None)
        if n:
            return int(n)
        kind = str(getattr(dev, "device_kind", "")).lower()
        if "v7" in kind:
            return 2
    except Exception:
        pass
    return 1


def _eltwise_mult_kernel(*refs):
    # refs = (in_ref_0, ..., in_ref_{n-1}, out_ref)
    in_refs = refs[:-1]
    out_ref = refs[-1]
    acc = in_refs[0][...]
    for r in in_refs[1:]:
        acc = acc * r[...]
    out_ref[...] = acc


def _pick_tile(total_units, unit_bytes, granularity, n_arrays, num_cores):
    """Units (rows / leading-dim slices) per block.

    Big enough to amortize the ~0.35us per-step overhead, small enough that the
    double-buffered footprint fits the VMEM budget; on 2-TC parts keep an even
    number of grid steps.  Returns None if even a minimal block does not fit
    (caller falls back to XLA).
    """
    per_block_cap = min(_MAX_BLOCK_BYTES, _VMEM_BUDGET_BYTES // (2 * n_arrays))
    if granularity * unit_bytes > per_block_cap:
        return None
    tile = (per_block_cap // unit_bytes) // granularity * granularity
    tile = max(granularity, min(tile, _round_up(total_units, granularity)))

    if num_cores >= 2:
        steps = _cdiv(total_units, tile)
        if steps == 1 and total_units > granularity:
            tile = _round_up(_cdiv(total_units, 2), granularity)
        elif steps > 1 and steps % 2 == 1:
            tile = _round_up(_cdiv(total_units, steps + 1), granularity)
        tile = max(granularity, tile)
    return tile


def _pallas_product(work, work_shape, dtype, grid, block_spec, block_bytes,
                    n_elem, itemsize, inplace):
    n_inputs = len(work)
    n_arrays = n_inputs + 1
    vmem_limit = int(min(
        max(32 * 1024 * 1024, n_arrays * 2 * block_bytes + _VMEM_SLACK_BYTES),
        56 * 1024 * 1024))
    aliases = {0: 0} if inplace else {}
    return pl.pallas_call(
        _eltwise_mult_kernel,
        out_shape=jax.ShapeDtypeStruct(work_shape, dtype),
        grid_spec=pltpu.PrefetchScalarGridSpec(
            num_scalar_prefetch=0,
            grid=grid,
            in_specs=[block_spec] * n_inputs,
            out_specs=block_spec,
        ),
        compiler_params=pltpu.CompilerParams(
            dimension_semantics=("parallel",),
            vmem_limit_bytes=vmem_limit,
        ),
        cost_estimate=pl.CostEstimate(
            flops=(n_inputs - 1) * n_elem,
            transcendentals=0,
            bytes_accessed=(n_inputs + 1) * n_elem * itemsize,
        ),
        input_output_aliases=aliases,
    )(*work)


def eltwise_mult(*inputs, inplace=False):
    """Elementwise product of all inputs (same shape & dtype)."""
    assert len(inputs) >= 1
    x0 = inputs[0]
    shape = x0.shape
    dtype = x0.dtype
    for t in inputs[1:]:
        assert t.shape == shape and t.dtype == dtype, (
            "EltwiseMult kernel expects identical shapes/dtypes")
        # TODO(synk): NumPy-style broadcasting between inputs (PyTorch `*`
        # semantics) is not supported in-kernel; identical shapes required.

    if len(inputs) == 1:
        return x0

    def xla_product():
        # XLA's fused elementwise product is already at HBM roofline; used for
        # tiny tensors and layout-unfriendly shapes.
        return functools.reduce(operator.mul, inputs)

    n_elem = int(math.prod(shape)) if shape else 1
    if n_elem < _SMALL_FAST_PATH_ELEMS or len(shape) < 2:
        return xla_product()

    itemsize = jnp.dtype(dtype).itemsize
    n_arrays = len(inputs) + 1
    gran = _sublane_granularity(dtype)
    cores = _cores_per_chip()

    R, C = shape[-2], shape[-1]
    L = int(math.prod(shape[:-2])) if len(shape) > 2 else 1

    rows = None
    if len(shape) == 2:
        # Tile the original 2-D array directly — no reshape at all.
        rows, cols = R, C
        work = list(inputs)
    elif R % gran == 0:
        # (..., R, C) -> (L*R, C) is a pure bitcast (no relayout copy).
        rows, cols = L * R, C
        work = [t.reshape(rows, cols) for t in inputs]

    if rows is not None:
        unit_bytes = cols * itemsize
        row_tile = _pick_tile(rows, unit_bytes, gran, n_arrays, cores)
        if row_tile is None:
            # TODO(synk): very wide rows would need column tiling (C % 128 == 0);
            # fall back to XLA instead of a relayout-inducing reshape.
            return xla_product()
        work_shape = (rows, cols)
        block = pl.BlockSpec((row_tile, cols), lambda i: (i, 0))
        grid = (_cdiv(rows, row_tile),)
        block_bytes = row_tile * unit_bytes
    else:
        # Collapse only the leading dims (always a bitcast); keep the last two
        # dims whole so the block satisfies the (8,128) "full dim" rule.
        work_shape = (L, R, C)
        work = [t.reshape(work_shape) for t in inputs]
        unit_bytes = R * C * itemsize
        l_tile = _pick_tile(L, unit_bytes, 1, n_arrays, cores)
        if l_tile is None:
            return xla_product()
        block = pl.BlockSpec((l_tile, R, C), lambda i: (i, 0, 0))
        grid = (_cdiv(L, l_tile),)
        block_bytes = l_tile * unit_bytes

    out = _pallas_product(work, work_shape, dtype, grid, block, block_bytes,
                          n_elem, itemsize, inplace)
    return out.reshape(shape)


if __name__ == "__main__":
    key = jax.random.PRNGKey(0)
    k = jax.random.split(key, 10)

    # 1) Module-spec small NCHW shape -> XLA fast path (kernel launch would lose).
    shape_small = (2, 4, 16, 16)
    a = jax.random.normal(k[0], shape_small, dtype=jnp.float32)
    b = jax.random.normal(k[1], shape_small, dtype=jnp.float32)
    c = jax.random.normal(k[2], shape_small, dtype=jnp.float32)
    out = jax.block_until_ready(eltwise_mult(a, b, c))
    assert out.shape == shape_small
    assert jnp.allclose(out, a * b * c, atol=1e-6, rtol=1e-6)

    # 2) Large layout-friendly NCHW shape -> Pallas row-tiled path (pure-bitcast
    #    collapse to (2048, 256)); also exercises the inplace aliasing hint.
    shape_big = (4, 8, 64, 256)  # 524288 elems
    a2 = jax.random.normal(k[3], shape_big, dtype=jnp.float32)
    b2 = jax.random.normal(k[4], shape_big, dtype=jnp.float32)
    out2 = jax.block_until_ready(eltwise_mult(a2, b2, inplace=True))
    assert out2.shape == shape_big
    assert jnp.allclose(out2, a2 * b2, atol=1e-6, rtol=1e-6)

    # 3) dim[-2] not a multiple of 8 and dim[-1] not a multiple of 128 ->
    #    3-D path: tile the leading dim, last two dims kept whole (no pad/slice).
    shape_odd = (512, 20, 30)  # 307200 elems
    a3 = jax.random.normal(k[5], shape_odd, dtype=jnp.float32)
    b3 = jax.random.normal(k[6], shape_odd, dtype=jnp.float32)
    c3 = jax.random.normal(k[7], shape_odd, dtype=jnp.float32)
    out3 = jax.block_until_ready(eltwise_mult(a3, b3, c3))
    assert out3.shape == shape_odd
    assert jnp.allclose(out3, a3 * b3 * c3, atol=1e-6, rtol=1e-6)

    # 4) bf16 -> exercises the 16-row sublane-packing granularity.
    shape_bf = (2, 16, 128, 128)  # 524288 elems
    a4 = jax.random.normal(k[8], shape_bf, dtype=jnp.bfloat16)
    b4 = jax.random.normal(k[9], shape_bf, dtype=jnp.bfloat16)
    out4 = jax.block_until_ready(eltwise_mult(a4, b4))
    assert out4.shape == shape_bf
    assert jnp.allclose(out4.astype(jnp.float32), (a4 * b4).astype(jnp.float32),
                        atol=1e-2, rtol=1e-2)

    print("KERNEL_OK")
</pallas_src>

<mosaic_0001>
module attributes {stable_mosaic.version = 11 : i64} {
  func.func @_eltwise_mult_kernel(%arg0: i32, %arg1: memref<2048x256xf32, #tpu.memory_space<vmem>>, %arg2: memref<2048x256xf32, #tpu.memory_space<vmem>>, %arg3: memref<2048x256xf32, #tpu.memory_space<vmem>>) attributes {dimension_semantics = [#tpu.dimension_semantics<parallel>], iteration_bounds = array<i64: 1>, scalar_prefetch = 0 : i64, scratch_operands = 0 : i64, tpu.core_type = #tpu.core_type<tc>, window_params = [{transform_indices = @transform_0, window_bounds = array<i64: 2048, 256>}, {transform_indices = @transform_1, window_bounds = array<i64: 2048, 256>}, {transform_indices = @transform_2, window_bounds = array<i64: 2048, 256>}]} {
    %c0 = arith.constant 0 : index
    %c0_0 = arith.constant 0 : index
    %0 = vector.load %arg1[%c0, %c0_0] : memref<2048x256xf32, #tpu.memory_space<vmem>>, vector<2048x256xf32>
    %c0_1 = arith.constant 0 : index
    %c0_2 = arith.constant 0 : index
    %1 = vector.load %arg2[%c0_1, %c0_2] : memref<2048x256xf32, #tpu.memory_space<vmem>>, vector<2048x256xf32>
    %2 = arith.mulf %0, %1 : vector<2048x256xf32>
    %c0_3 = arith.constant 0 : index
    %c0_4 = arith.constant 0 : index
    %3 = vector.load %arg3[%c0_3, %c0_4] : memref<2048x256xf32, #tpu.memory_space<vmem>>, vector<2048x256xf32>
    tpu.vector_store %arg3[%c0_3, %c0_4], %2 {strides = array<i32>} : memref<2048x256xf32, #tpu.memory_space<vmem>>, vector<2048x256xf32>,
    return
  }
  func.func @transform_0(%arg0: i32) -> (i32, i32) {
    %c0_i32 = arith.constant 0 : i32
    %c0_i32_0 = arith.constant 0 : i32
    return %arg0, %c0_i32 : i32, i32
  }
  func.func @transform_1(%arg0: i32) -> (i32, i32) {
    %c0_i32 = arith.constant 0 : i32
    %c0_i32_0 = arith.constant 0 : i32
    return %arg0, %c0_i32 : i32, i32
  }
  func.func @transform_2(%arg0: i32) -> (i32, i32) {
    %c0_i32 = arith.constant 0 : i32
    %c0_i32_0 = arith.constant 0 : i32
    return %arg0, %c0_i32 : i32, i32
  }
}

</mosaic_0001>

<llo_original>
// kernel: tpu_custom_call.1
$region0: #{tpu_custom_call.1}
  #allocation0 [shape = 'u32[]', space=smem, size = 0x4, offset = 0x4, fixed_abs, tag = 'smem constant byte address 0x4 - core index']
  #allocation1 [shape = 'u32[144,128]{1,0:T(1,128)}', space=vmem, size = 0x12000, scoped, tag = 'internal scratch']
  %s0 = inlined_call_operand.hbm [shape: f32[2048,256], index: 0, kind: input, shape index: {}, may-alias: {0,2}]
  %s1 = inlined_call_operand.vmem [shape: f32[2048,256], index: 1, kind: input, shape index: {}]
  %s2 = inlined_call_operand.hbm [shape: f32[2048,256], index: 2, kind: output, shape index: {}, may-alias: {0,2}]
  %s3 = sld [smem:[#allocation0]]
  $region22: #{tpu_custom_call.1} parent=0
    _
  %s5 = ssub.s32 1, %s3
  %s6 = scalar_select 0, %s5, %s3
  $region1: #{tpu_custom_call.1} parent=0
    #allocation2 [shape = 'u8[2097152]{0}', space=vmem, size = 0x200000, scoped, tag = 'input window, operand 0, single buffered']
    #allocation3 [shape = 's32[1]{0}', space=sflag, size = 0x4, scoped, tag = 'scoped memory for tpu_custom_call.1']
    #allocation4 [shape = 's32[1]{0}', space=sflag, size = 0x4, scoped, tag = 'scoped memory for tpu_custom_call.1']
    #allocation5 [shape = 'u8[2097152]{0}', space=vmem, size = 0x200000, scoped, tag = 'output window, operand 0, single buffered']
    %7 = vsyncpa [#allocation3], 0
    %8 = vsyncpa [#allocation4], 0
    // Predicated region
    $region2: #{tpu_custom_call.1} parent=1 // pred_check
      _
    $region3: #{tpu_custom_call.1} parent=1 // pred_check_branch
      %10 = sbr.rel (0) target = $region5
    $region4: #{tpu_custom_call.1} parent=1 // pred_region
      %s12 = ssub.s32 65536, 65536
      %13 = vsyncadd [#allocation3], %s12
      %s14 = sshll.u32 [#allocation2], 4
      %s15 = int_to_ptr.vmem [resolvable:$true] %s14
      %20 = dma.hbm_to_vmem [thread:$0]  %s0, 65536, %s15, [#allocation3], 256, 256, 16
    $region5: #{tpu_custom_call.1} parent=1 // pred_fallthru
      _
    // Predicated region
    $region6: #{tpu_custom_call.1} parent=1 // pred_check
      _
    $region7: #{tpu_custom_call.1} parent=1 // pred_check_branch
      %22 = sbr.rel (0) target = $region9
    $region8: #{tpu_custom_call.1} parent=1 // pred_region
      _
    $region9: #{tpu_custom_call.1} parent=1 // pred_fallthru
      _
    // Predicated region
    $region10: #{tpu_custom_call.1} parent=1 // pred_check
      _
    $region11: #{tpu_custom_call.1} parent=1 // pred_check_branch
      %24 = sbr.rel (0) target = $region13
    $region12: #{tpu_custom_call.1} parent=1 // pred_region
      %25 = dma.done [#allocation3], 65536
    $region13: #{tpu_custom_call.1} parent=1 // pred_fallthru
      _
    %v26 = vld [vmem:[#allocation2] sm:$0xff]
    %v27 = vld [vmem:[#allocation2 + $0x8] sm:$0xff]
    %v28 = vld [vmem:[#allocation2 + $0x10] sm:$0xff]
    %v29 = vld [vmem:[#allocation2 + $0x18] sm:$0xff]
    %v30 = vld [vmem:[#allocation2 + $0x20] sm:$0xff]
    %v31 = vld [vmem:[#allocation2 + $0x28] sm:$0xff]
    %v32 = vld [vmem:[#allocation2 + $0x30] sm:$0xff]
    %v33 = vld [vmem:[#allocation2 + $0x38] sm:$0xff]
    %v34 = vld [vmem:[#allocation2 + $0x40] sm:$0xff]
    %v35 = vld [vmem:[#allocation2 + $0x48] sm:$0xff]
    %v36 = vld [vmem:[#allocation2 + $0x50] sm:$0xff]
    %v37 = vld [vmem:[#allocation2 + $0x58] sm:$0xff]
    %v38 = vld [vmem:[#allocation2 + $0x60] sm:$0xff]
    %v39 = vld [vmem:[#allocation2 + $0x68] sm:$0xff]
    %v40 = vld [vmem:[#allocation2 + $0x70] sm:$0xff]
    %v41 = vld [vmem:[#allocation2 + $0x78] sm:$0xff]
    %v42 = vld [vmem:[#allocation2 + $0x80] sm:$0xff]
    %v43 = vld [vmem:[#allocation2 + $0x88] sm:$0xff]
    %v44 = vld [vmem:[#allocation2 + $0x90] sm:$0xff]
    %v45 = vld [vmem:[#allocation2 + $0x98] sm:$0xff]
    %v46 = vld [vmem:[#allocation2 + $0xa0] sm:$0xff]
    %v47 = vld [vmem:[#allocation2 + $0xa8] sm:$0xff]
    %v48 = vld [vmem:[#allocation2 + $0xb0] sm:$0xff]
    %v49 = vld [vmem:[#allocation2 + $0xb8] sm:$0xff]
    %v50 = vld [vmem:[#allocation2 + $0xc0] sm:$0xff]
    %v51 = vld [vmem:[#allocation2 + $0xc8] sm:$0xff]
    %v52 = vld [vmem:[#allocation2 + $0xd0] sm:$0xff]
    %v53 = vld [vmem:[#allocation2 + $0xd8] sm:$0xff]
    %v54 = vld [vmem:[#allocation2 + $0xe0] sm:$0xff]
    %v55 = vld [vmem:[#allocation2 + $0xe8] sm:$0xff]
    %v56 = vld [vmem:[#allocation2 + $0xf0] sm:$0xff]
    %v57 = vld [vmem:[#allocation2 + $0xf8] sm:$0xff]
    %v58 = vld [vmem:[#allocation2 + $0x100] sm:$0xff]
    %v59 = vld [vmem:[#allocation2 + $0x108] sm:$0xff]
    %v60 = vld [vmem:[#allocation2 + $0x110] sm:$0xff]
    %v61 = vld [vmem:[#allocation2 + $0x118] sm:$0xff]
    %v62 = vld [vmem:[#allocation2 + $0x120] sm:$0xff]
    %v63 = vld [vmem:[#allocation2 + $0x128] sm:$0xff]
    %v64 = vld [vmem:[#allocation2 + $0x130] sm:$0xff]
    %v65 = vld [vmem:[#allocation2 + $0x138] sm:$0xff]
    %v66 = vld [vmem:[#allocation2 + $0x140] sm:$0xff]
    %v67 = vld [vmem:[#allocation2 + $0x148] sm:$0xff]
    %v68 = vld [vmem:[#allocation2 + $0x150] sm:$0xff]
    %v69 = vld [vmem:[#allocation2 + $0x158] sm:$0xff]
    %v70 = vld [vmem:[#allocation2 + $0x160] sm:$0xff]
    %v71 = vld [vmem:[#allocation2 + $0x168] sm:$0xff]
    %v72 = vld [vmem:[#allocation2 + $0x170] sm:$0xff]
    %v73 = vld [vmem:[#allocation2 + $0x178] sm:$0xff]
    %v74 = vld [vmem:[#allocation2 + $0x180] sm:$0xff]
    %v75 = vld [vmem:[#allocation2 + $0x188] sm:$0xff]
    %v76 = vld [vmem:[#allocation2 + $0x190] sm:$0xff]
    %v77 = vld [vmem:[#allocation2 + $0x198] sm:$0xff]
    %v78 = vld [vmem:[#allocation2 + $0x1a0] sm:$0xff]
    %v79 = vld [vmem:[#allocation2 + $0x1a8] sm:$0xff]
    %v80 = vld [vmem:[#allocation2 + $0x1b0] sm:$0xff]
    %v81 = vld [vmem:[#allocation2 + $0x1b8] sm:$0xff]
    %v82 = vld [vmem:[#allocation2 + $0x1c0] sm:$0xff]
    %v83 = vld [vmem:[#allocation2 + $0x1c8] sm:$0xff]
    %v84 = vld [vmem:[#allocation2 + $0x1d0] sm:$0xff]
    %v85 = vld [vmem:[#allocation2 + $0x1d8] sm:$0xff]
    %v86 = vld [vmem:[#allocation2 + $0x1e0] sm:$0xff]
    %v87 = vld [vmem:[#allocation2 + $0x1e8] sm:$0xff]
    %v88 = vld [vmem:[#allocation2 + $0x1f0] sm:$0xff]
    %v89 = vld [vmem:[#allocation2 + $0x1f8] sm:$0xff]
    %v90 = vld [vmem:[#allocation2 + $0x200] sm:$0xff]
    %v91 = vld [vmem:[#allocation2 + $0x208] sm:$0xff]
    %v92 = vld [vmem:[#allocation2 + $0x210] sm:$0xff]
    %v93 = vld [vmem:[#allocation2 + $0x218] sm:$0xff]
    %v94 = vld [vmem:[#allocation2 + $0x220] sm:$0xff]
    %v95 = vld [vmem:[#allocation2 + $0x228] sm:$0xff]
    %v96 = vld [vmem:[#allocation2 + $0x230] sm:$0xff]
    %v97 = vld [vmem:[#allocation2 + $0x238] sm:$0xff]
    %v98 = vld [vmem:[#allocation2 + $0x240] sm:$0xff]
    %v99 = vld [vmem:[#allocation2 + $0x248] sm:$0xff]
    %v100 = vld [vmem:[#allocation2 + $0x250] sm:$0xff]
    %v101 = vld [vmem:[#allocation2 + $0x258] sm:$0xff]
    %v102 = vld [vmem:[#allocation2 + $0x260] sm:$0xff]
    %v103 = vld [vmem:[#allocation2 + $0x268] sm:$0xff]
    %v104 = vld [vmem:[#allocation2 + $0x270] sm:$0xff]
    %v105 = vld [vmem:[#allocation2 + $0x278] sm:$0xff]
    %v106 = vld [vmem:[#allocation2 + $0x280] sm:$0xff]
    %v107 = vld [vmem:[#allocation2 + $0x288] sm:$0xff]
    %v108 = vld [vmem:[#allocation2 + $0x290] sm:$0xff]
    %v109 = vld [vmem:[#allocation2 + $0x298] sm:$0xff]
    %v110 = vld [vmem:[#allocation2 + $0x2a0] sm:$0xff]
    %v111 = vld [vmem:[#allocation2 + $0x2a8] sm:$0xff]
    %v112 = vld [vmem:[#allocation2 + $0x2b0] sm:$0xff]
    %v113 = vld [vmem:[#allocation2 + $0x2b8] sm:$0xff]
    %v114 = vld [vmem:[#allocation2 + $0x2c0] sm:$0xff]
    %v115 = vld [vmem:[#allocation2 + $0x2c8] sm:$0xff]
    %v116 = vld [vmem:[#allocation2 + $0x2d0] sm:$0xff]
    %v117 = vld [vmem:[#allocation2 + $0x2d8] sm:$0xff]
    %v118 = vld [vmem:[#allocation2 + $0x2e0] sm:$0xff]
    %v119 = vld [vmem:[#allocation2 + $0x2e8] sm:$0xff]
    %v120 = vld [vmem:[#allocation2 + $0x2f0] sm:$0xff]
    %v121 = vld [vmem:[#allocation2 + $0x2f8] sm:$0xff]
    %v122 = vld [vmem:[#allocation2 + $0x300] sm:$0xff]
    %v123 = vld [vmem:[#allocation2 + $0x308] sm:$0xff]
    %v124 = vld [vmem:[#allocation2 + $0x310] sm:$0xff]
    %v125 = vld [vmem:[#allocation2 + $0x318] sm:$0xff]
    %v126 = vld [vmem:[#allocation2 + $0x320] sm:$0xff]
    %v127 = vld [vmem:[#allocation2 + $0x328] sm:$0xff]
    %v128 = vld [vmem:[#allocation2 + $0x330] sm:$0xff]
    %v129 = vld [vmem:[#allocation2 + $0x338] sm:$0xff]
    %v130 = vld [vmem:[#allocation2 + $0x340] sm:$0xff]
    %v131 = vld [vmem:[#allocation2 + $0x348] sm:$0xff]
    %v132 = vld [vmem:[#allocation2 + $0x350] sm:$0xff]
    %v133 = vld [vmem:[#allocation2 + $0x358] sm:$0xff]
    %v134 = vld [vmem:[#allocation2 + $0x360] sm:$0xff]
    %v135 = vld [vmem:[#allocation2 + $0x368] sm:$0xff]
    %v136 = vld [vmem:[#allocation2 + $0x370] sm:$0xff]
    %v137 = vld [vmem:[#allocation2 + $0x378] sm:$0xff]
    %v138 = vld [vmem:[#allocation2 + $0x380] sm:$0xff]
    %v139 = vld [vmem:[#allocation2 + $0x388] sm:$0xff]
    %v140 = vld [vmem:[#allocation2 + $0x390] sm:$0xff]
    %v141 = vld [vmem:[#allocation2 + $0x398] sm:$0xff]
    %v142 = vld [vmem:[#allocation2 + $0x3a0] sm:$0xff]
    %v143 = vld [vmem:[#allocation2 + $0x3a8] sm:$0xff]
    %v144 = vld [vmem:[#allocation2 + $0x3b0] sm:$0xff]
    %v145 = vld [vmem:[#allocation2 + $0x3b8] sm:$0xff]
    %v146 = vld [vmem:[#allocation2 + $0x3c0] sm:$0xff]
    %v147 = vld [vmem:[#allocation2 + $0x3c8] sm:$0xff]
    %v148 = vld [vmem:[#allocation2 + $0x3d0] sm:$0xff]
    %v149 = vld [vmem:[#allocation2 + $0x3d8] sm:$0xff]
    %v150 = vld [vmem:[#allocation2 + $0x3e0] sm:$0xff]
    %v151 = vld [vmem:[#allocation2 + $0x3e8] sm:$0xff]
    %v152 = vld [vmem:[#allocation2 + $0x3f0] sm:$0xff]
    %v153 = vld [vmem:[#allocation2 + $0x3f8] sm:$0xff]
    %v154 = vld [vmem:[#allocation2 + $0x400] sm:$0xff]
    %v155 = vld [vmem:[#allocation2 + $0x408] sm:$0xff]
    %v156 = vld [vmem:[#allocation2 + $0x410] sm:$0xff]
    %v157 = vld [vmem:[#allocation2 + $0x418] sm:$0xff]
    %v158 = vld [vmem:[#allocation2 + $0x420] sm:$0xff]
    %v159 = vld [vmem:[#allocation2 + $0x428] sm:$0xff]
    %v160 = vld [vmem:[#allocation2 + $0x430] sm:$0xff]
    %v161 = vld [vmem:[#allocation2 + $0x438] sm:$0xff]
    %v162 = vld [vmem:[#allocation2 + $0x440] sm:$0xff]
    %v163 = vld [vmem:[#allocation2 + $0x448] sm:$0xff]
    %v164 = vld [vmem:[#allocation2 + $0x450] sm:$0xff]
    %v165 = vld [vmem:[#allocation2 + $0x458] sm:$0xff]
    %v166 = vld [vmem:[#allocation2 + $0x460] sm:$0xff]
    %v167 = vld [vmem:[#allocation2 + $0x468] sm:$0xff]
    %v168 = vld [vmem:[#allocation2 + $0x470] sm:$0xff]
    %v169 = vld [vmem:[#allocation2 + $0x478] sm:$0xff]
    %v170 = vld [vmem:[#allocation2 + $0x480] sm:$0xff]
    %v171 = vld [vmem:[#allocation2 + $0x488] sm:$0xff]
    %v172 = vld [vmem:[#allocation2 + $0x490] sm:$0xff]
    %v173 = vld [vmem:[#allocation2 + $0x498] sm:$0xff]
    %v174 = vld [vmem:[#allocation2 + $0x4a0] sm:$0xff]
    %v175 = vld [vmem:[#allocation2 + $0x4a8] sm:$0xff]
    %v176 = vld [vmem:[#allocation2 + $0x4b0] sm:$0xff]
    %v177 = vld [vmem:[#allocation2 + $0x4b8] sm:$0xff]
    %v178 = vld [vmem:[#allocation2 + $0x4c0] sm:$0xff]
    %v179 = vld [vmem:[#allocation2 + $0x4c8] sm:$0xff]
    %v180 = vld [vmem:[#allocation2 + $0x4d0] sm:$0xff]
    %v181 = vld [vmem:[#allocation2 + $0x4d8] sm:$0xff]
    %v182 = vld [vmem:[#allocation2 + $0x4e0] sm:$0xff]
    %v183 = vld [vmem:[#allocation2 + $0x4e8] sm:$0xff]
    %v184 = vld [vmem:[#allocation2 + $0x4f0] sm:$0xff]
    %v185 = vld [vmem:[#allocation2 + $0x4f8] sm:$0xff]
    %v186 = vld [vmem:[#allocation2 + $0x500] sm:$0xff]
    %v187 = vld [vmem:[#allocation2 + $0x508] sm:$0xff]
    %v188 = vld [vmem:[#allocation2 + $0x510] sm:$0xff]
    %v189 = vld [vmem:[#allocation2 + $0x518] sm:$0xff]
    %v190 = vld [vmem:[#allocation2 + $0x520] sm:$0xff]
    %v191 = vld [vmem:[#allocation2 + $0x528] sm:$0xff]
    %v192 = vld [vmem:[#allocation2 + $0x530] sm:$0xff]
    %v193 = vld [vmem:[#allocation2 + $0x538] sm:$0xff]
    %v194 = vld [vmem:[#allocation2 + $0x540] sm:$0xff]
    %v195 = vld [vmem:[#allocation2 + $0x548] sm:$0xff]
    %v196 = vld [vmem:[#allocation2 + $0x550] sm:$0xff]
    %v197 = vld [vmem:[#allocation2 + $0x558] sm:$0xff]
    %v198 = vld [vmem:[#allocation2 + $0x560] sm:$0xff]
    %v199 = vld [vmem:[#allocation2 + $0x568] sm:$0xff]
    %v200 = vld [vmem:[#allocation2 + $0x570] sm:$0xff]
    %v201 = vld [vmem:[#allocation2 + $0x578] sm:$0xff]
    %v202 = vld [vmem:[#allocation2 + $0x580] sm:$0xff]
    %v203 = vld [vmem:[#allocation2 + $0x588] sm:$0xff]
    %v204 = vld [vmem:[#allocation2 + $0x590] sm:$0xff]
    %v205 = vld [vmem:[#allocation2 + $0x598] sm:$0xff]
    %v206 = vld [vmem:[#allocation2 + $0x5a0] sm:$0xff]
    %v207 = vld [vmem:[#allocation2 + $0x5a8] sm:$0xff]
    %v208 = vld [vmem:[#allocation2 + $0x5b0] sm:$0xff]
    %v209 = vld [vmem:[#allocation2 + $0x5b8] sm:$0xff]
    %v210 = vld [vmem:[#allocation2 + $0x5c0] sm:$0xff]
    %v211 = vld [vmem:[#allocation2 + $0x5c8] sm:$0xff]
    %v212 = vld [vmem:[#allocation2 + $0x5d0] sm:$0xff]
    %v213 = vld [vmem:[#allocation2 + $0x5d8] sm:$0xff]
    %v214 = vld [vmem:[#allocation2 + $0x5e0] sm:$0xff]
    %v215 = vld [vmem:[#allocation2 + $0x5e8] sm:$0xff]
    %v216 = vld [vmem:[#allocation2 + $0x5f0] sm:$0xff]
    %v217 = vld [vmem:[#allocation2 + $0x5f8] sm:$0xff]
    %v218 = vld [vmem:[#allocation2 + $0x600] sm:$0xff]
    %v219 = vld [vmem:[#allocation2 + $0x608] sm:$0xff]
    %v220 = vld [vmem:[#allocation2 + $0x610] sm:$0xff]
    %v221 = vld [vmem:[#allocation2 + $0x618] sm:$0xff]
    %v222 = vld [vmem:[#allocation2 + $0x620] sm:$0xff]
    %v223 = vld [vmem:[#allocation2 + $0x628] sm:$0xff]
    %v224 = vld [vmem:[#allocation2 + $0x630] sm:$0xff]
    %v225 = vld [vmem:[#allocation2 + $0x638] sm:$0xff]
    %v226 = vld [vmem:[#allocation2 + $0x640] sm:$0xff]
    %v227 = vld [vmem:[#allocation2 + $0x648] sm:$0xff]
    %v228 = vld [vmem:[#allocation2 + $0x650] sm:$0xff]
    %v229 = vld [vmem:[#allocation2 + $0x658] sm:$0xff]
    %v230 = vld [vmem:[#allocation2 + $0x660] sm:$0xff]
    %v231 = vld [vmem:[#allocation2 + $0x668] sm:$0xff]
    %v232 = vld [vmem:[#allocation2 + $0x670] sm:$0xff]
    %v233 = vld [vmem:[#allocation2 + $0x678] sm:$0xff]
    %v234 = vld [vmem:[#allocation2 + $0x680] sm:$0xff]
    %v235 = vld [vmem:[#allocation2 + $0x688] sm:$0xff]
    %v236 = vld [vmem:[#allocation2 + $0x690] sm:$0xff]
    %v237 = vld [vmem:[#allocation2 + $0x698] sm:$0xff]
    %v238 = vld [vmem:[#allocation2 + $0x6a0] sm:$0xff]
    %v239 = vld [vmem:[#allocation2 + $0x6a8] sm:$0xff]
    %v240 = vld [vmem:[#allocation2 + $0x6b0] sm:$0xff]
    %v241 = vld [vmem:[#allocation2 + $0x6b8] sm:$0xff]
    %v242 = vld [vmem:[#allocation2 + $0x6c0] sm:$0xff]
    %v243 = vld [vmem:[#allocation2 + $0x6c8] sm:$0xff]
    %v244 = vld [vmem:[#allocation2 + $0x6d0] sm:$0xff]
    %v245 = vld [vmem:[#allocation2 + $0x6d8] sm:$0xff]
    %v246 = vld [vmem:[#allocation2 + $0x6e0] sm:$0xff]
    %v247 = vld [vmem:[#allocation2 + $0x6e8] sm:$0xff]
    %v248 = vld [vmem:[#allocation2 + $0x6f0] sm:$0xff]
    %v249 = vld [vmem:[#allocation2 + $0x6f8] sm:$0xff]
    %v250 = vld [vmem:[#allocation2 + $0x700] sm:$0xff]
    %v251 = vld [vmem:[#allocation2 + $0x708] sm:$0xff]
    %v252 = vld [vmem:[#allocation2 + $0x710] sm:$0xff]
    %v253 = vld [vmem:[#allocation2 + $0x718] sm:$0xff]
    %v254 = vld [vmem:[#allocation2 + $0x720] sm:$0xff]
    %v255 = vld [vmem:[#allocation2 + $0x728] sm:$0xff]
    %v256 = vld [vmem:[#allocation2 + $0x730] sm:$0xff]
    %v257 = vld [vmem:[#allocation2 + $0x738] sm:$0xff]
    %v258 = vld [vmem:[#allocation2 + $0x740] sm:$0xff]
    %v259 = vld [vmem:[#allocation2 + $0x748] sm:$0xff]
    %v260 = vld [vmem:[#allocation2 + $0x750] sm:$0xff]
    %v261 = vld [vmem:[#allocation2 + $0x758] sm:$0xff]
    %v262 = vld [vmem:[#allocation2 + $0x760] sm:$0xff]
    %v263 = vld [vmem:[#allocation2 + $0x768] sm:$0xff]
    %v264 = vld [vmem:[#allocation2 + $0x770] sm:$0xff]
    %v265 = vld [vmem:[#allocation2 + $0x778] sm:$0xff]
    %v266 = vld [vmem:[#allocation2 + $0x780] sm:$0xff]
    %v267 = vld [vmem:[#allocation2 + $0x788] sm:$0xff]
    %v268 = vld [vmem:[#allocation2 + $0x790] sm:$0xff]
    %v269 = vld [vmem:[#allocation2 + $0x798] sm:$0xff]
    %v270 = vld [vmem:[#allocation2 + $0x7a0] sm:$0xff]
    %v271 = vld [vmem:[#allocation2 + $0x7a8] sm:$0xff]
    %v272 = vld [vmem:[#allocation2 + $0x7b0] sm:$0xff]
    %v273 = vld [vmem:[#allocation2 + $0x7b8] sm:$0xff]
    %v274 = vld [vmem:[#allocation2 + $0x7c0] sm:$0xff]
    %v275 = vld [vmem:[#allocation2 + $0x7c8] sm:$0xff]
    %v276 = vld [vmem:[#allocation2 + $0x7d0] sm:$0xff]
    %v277 = vld [vmem:[#allocation2 + $0x7d8] sm:$0xff]
    %v278 = vld [vmem:[#allocation2 + $0x7e0] sm:$0xff]
    %v279 = vld [vmem:[#allocation2 + $0x7e8] sm:$0xff]
    %v280 = vld [vmem:[#allocation2 + $0x7f0] sm:$0xff]
    %v281 = vld [vmem:[#allocation2 + $0x7f8] sm:$0xff]
    %v282 = vld [vmem:[#allocation2 + $0x800] sm:$0xff]
    %v283 = vld [vmem:[#allocation2 + $0x808] sm:$0xff]
    %v284 = vld [vmem:[#allocation2 + $0x810] sm:$0xff]
    %v285 = vld [vmem:[#allocation2 + $0x818] sm:$0xff]
    %v286 = vld [vmem:[#allocation2 + $0x820] sm:$0xff]
    %v287 = vld [vmem:[#allocation2 + $0x828] sm:$0xff]
    %v288 = vld [vmem:[#allocation2 + $0x830] sm:$0xff]
    %v289 = vld [vmem:[#allocation2 + $0x838] sm:$0xff]
    %v290 = vld [vmem:[#allocation2 + $0x840] sm:$0xff]
    %v291 = vld [vmem:[#allocation2 + $0x848] sm:$0xff]
    %v292 = vld [vmem:[#allocation2 + $0x850] sm:$0xff]
    %v293 = vld [vmem:[#allocation2 + $0x858] sm:$0xff]
    %v294 = vld [vmem:[#allocation2 + $0x860] sm:$0xff]
    %v295 = vld [vmem:[#allocation2 + $0x868] sm:$0xff]
    %v296 = vld [vmem:[#allocation2 + $0x870] sm:$0xff]
    %v297 = vld [vmem:[#allocation2 + $0x878] sm:$0xff]
    %v298 = vld [vmem:[#allocation2 + $0x880] sm:$0xff]
    %v299 = vld [vmem:[#allocation2 + $0x888] sm:$0xff]
    %v300 = vld [vmem:[#allocation2 + $0x890] sm:$0xff]
    %v301 = vld [vmem:[#allocation2 + $0x898] sm:$0xff]
    %v302 = vld [vmem:[#allocation2 + $0x8a0] sm:$0xff]
    %v303 = vld [vmem:[#allocation2 + $0x8a8] sm:$0xff]
    %v304 = vld [vmem:[#allocation2 + $0x8b0] sm:$0xff]
    %v305 = vld [vmem:[#allocation2 + $0x8b8] sm:$0xff]
    %v306 = vld [vmem:[#allocation2 + $0x8c0] sm:$0xff]
    %v307 = vld [vmem:[#allocation2 + $0x8c8] sm:$0xff]
    %v308 = vld [vmem:[#allocation2 + $0x8d0] sm:$0xff]
    %v309 = vld [vmem:[#allocation2 + $0x8d8] sm:$0xff]
    %v310 = vld [vmem:[#allocation2 + $0x8e0] sm:$0xff]
    %v311 = vld [vmem:[#allocation2 + $0x8e8] sm:$0xff]
    %v312 = vld [vmem:[#allocation2 + $0x8f0] sm:$0xff]
    %v313 = vld [vmem:[#allocation2 + $0x8f8] sm:$0xff]
    %v314 = vld [vmem:[#allocation2 + $0x900] sm:$0xff]
    %v315 = vld [vmem:[#allocation2 + $0x908] sm:$0xff]
    %v316 = vld [vmem:[#allocation2 + $0x910] sm:$0xff]
    %v317 = vld [vmem:[#allocation2 + $0x918] sm:$0xff]
    %v318 = vld [vmem:[#allocation2 + $0x920] sm:$0xff]
    %v319 = vld [vmem:[#allocation2 + $0x928] sm:$0xff]
    %v320 = vld [vmem:[#allocation2 + $0x930] sm:$0xff]
    %v321 = vld [vmem:[#allocation2 + $0x938] sm:$0xff]
    %v322 = vld [vmem:[#allocation2 + $0x940] sm:$0xff]
    %v323 = vld [vmem:[#allocation2 + $0x948] sm:$0xff]
    %v324 = vld [vmem:[#allocation2 + $0x950] sm:$0xff]
    %v325 = vld [vmem:[#allocation2 + $0x958] sm:$0xff]
    %v326 = vld [vmem:[#allocation2 + $0x960] sm:$0xff]
    %v327 = vld [vmem:[#allocation2 + $0x968] sm:$0xff]
    %v328 = vld [vmem:[#allocation2 + $0x970] sm:$0xff]
    %v329 = vld [vmem:[#allocation2 + $0x978] sm:$0xff]
    %v330 = vld [vmem:[#allocation2 + $0x980] sm:$0xff]
    %v331 = vld [vmem:[#allocation2 + $0x988] sm:$0xff]
    %v332 = vld [vmem:[#allocation2 + $0x990] sm:$0xff]
    %v333 = vld [vmem:[#allocation2 + $0x998] sm:$0xff]
    %v334 = vld [vmem:[#allocation2 + $0x9a0] sm:$0xff]
    %v335 = vld [vmem:[#allocation2 + $0x9a8] sm:$0xff]
    %v336 = vld [vmem:[#allocation2 + $0x9b0] sm:$0xff]
    %v337 = vld [vmem:[#allocation2 + $0x9b8] sm:$0xff]
    %v338 = vld [vmem:[#allocation2 + $0x9c0] sm:$0xff]
    %v339 = vld [vmem:[#allocation2 + $0x9c8] sm:$0xff]
    %v340 = vld [vmem:[#allocation2 + $0x9d0] sm:$0xff]
    %v341 = vld [vmem:[#allocation2 + $0x9d8] sm:$0xff]
    %v342 = vld [vmem:[#allocation2 + $0x9e0] sm:$0xff]
    %v343 = vld [vmem:[#allocation2 + $0x9e8] sm:$0xff]
    %v344 = vld [vmem:[#allocation2 + $0x9f0] sm:$0xff]
    %v345 = vld [vmem:[#allocation2 + $0x9f8] sm:$0xff]
    %v346 = vld [vmem:[#allocation2 + $0xa00] sm:$0xff]
    %v347 = vld [vmem:[#allocation2 + $0xa08] sm:$0xff]
    %v348 = vld [vmem:[#allocation2 + $0xa10] sm:$0xff]
    %v349 = vld [vmem:[#allocation2 + $0xa18] sm:$0xff]
    %v350 = vld [vmem:[#allocation2 + $0xa20] sm:$0xff]
    %v351 = vld [vmem:[#allocation2 + $0xa28] sm:$0xff]
    %v352 = vld [vmem:[#allocation2 + $0xa30] sm:$0xff]
    %v353 = vld [vmem:[#allocation2 + $0xa38] sm:$0xff]
    %v354 = vld [vmem:[#allocation2 + $0xa40] sm:$0xff]
    %v355 = vld [vmem:[#allocation2 + $0xa48] sm:$0xff]
    %v356 = vld [vmem:[#allocation2 + $0xa50] sm:$0xff]
    %v357 = vld [vmem:[#allocation2 + $0xa58] sm:$0xff]
    %v358 = vld [vmem:[#allocation2 + $0xa60] sm:$0xff]
    %v359 = vld [vmem:[#allocation2 + $0xa68] sm:$0xff]
    %v360 = vld [vmem:[#allocation2 + $0xa70] sm:$0xff]
    %v361 = vld [vmem:[#allocation2 + $0xa78] sm:$0xff]
    %v362 = vld [vmem:[#allocation2 + $0xa80] sm:$0xff]
    %v363 = vld [vmem:[#allocation2 + $0xa88] sm:$0xff]
    %v364 = vld [vmem:[#allocation2 + $0xa90] sm:$0xff]
    %v365 = vld [vmem:[#allocation2 + $0xa98] sm:$0xff]
    %v366 = vld [vmem:[#allocation2 + $0xaa0] sm:$0xff]
    %v367 = vld [vmem:[#allocation2 + $0xaa8] sm:$0xff]
    %v368 = vld [vmem:[#allocation2 + $0xab0] sm:$0xff]
    %v369 = vld [vmem:[#allocation2 + $0xab8] sm:$0xff]
    %v370 = vld [vmem:[#allocation2 + $0xac0] sm:$0xff]
    %v371 = vld [vmem:[#allocation2 + $0xac8] sm:$0xff]
    %v372 = vld [vmem:[#allocation2 + $0xad0] sm:$0xff]
    %v373 = vld [vmem:[#allocation2 + $0xad8] sm:$0xff]
    %v374 = vld [vmem:[#allocation2 + $0xae0] sm:$0xff]
    %v375 = vld [vmem:[#allocation2 + $0xae8] sm:$0xff]
    %v376 = vld [vmem:[#allocation2 + $0xaf0] sm:$0xff]
    %v377 = vld [vmem:[#allocation2 + $0xaf8] sm:$0xff]
    %v378 = vld [vmem:[#allocation2 + $0xb00] sm:$0xff]
    %v379 = vld [vmem:[#allocation2 + $0xb08] sm:$0xff]
    %v380 = vld [vmem:[#allocation2 + $0xb10] sm:$0xff]
    %v381 = vld [vmem:[#allocation2 + $0xb18] sm:$0xff]
    %v382 = vld [vmem:[#allocation2 + $0xb20] sm:$0xff]
    %v383 = vld [vmem:[#allocation2 + $0xb28] sm:$0xff]
    %v384 = vld [vmem:[#allocation2 + $0xb30] sm:$0xff]
    %v385 = vld [vmem:[#allocation2 + $0xb38] sm:$0xff]
    %v386 = vld [vmem:[#allocation2 + $0xb40] sm:$0xff]
    %v387 = vld [vmem:[#allocation2 + $0xb48] sm:$0xff]
    %v388 = vld [vmem:[#allocation2 + $0xb50] sm:$0xff]
    %v389 = vld [vmem:[#allocation2 + $0xb58] sm:$0xff]
    %v390 = vld [vmem:[#allocation2 + $0xb60] sm:$0xff]
    %v391 = vld [vmem:[#allocation2 + $0xb68] sm:$0xff]
    %v392 = vld [vmem:[#allocation2 + $0xb70] sm:$0xff]
    %v393 = vld [vmem:[#allocation2 + $0xb78] sm:$0xff]
    %v394 = vld [vmem:[#allocation2 + $0xb80] sm:$0xff]
    %v395 = vld [vmem:[#allocation2 + $0xb88] sm:$0xff]
    %v396 = vld [vmem:[#allocation2 + $0xb90] sm:$0xff]
    %v397 = vld [vmem:[#allocation2 + $0xb98] sm:$0xff]
    %v398 = vld [vmem:[#allocation2 + $0xba0] sm:$0xff]
    %v399 = vld [vmem:[#allocation2 + $0xba8] sm:$0xff]
    %v400 = vld [vmem:[#allocation2 + $0xbb0] sm:$0xff]
    %v401 = vld [vmem:[#allocation2 + $0xbb8] sm:$0xff]
    %v402 = vld [vmem:[#allocation2 + $0xbc0] sm:$0xff]
    %v403 = vld [vmem:[#allocation2 + $0xbc8] sm:$0xff]
    %v404 = vld [vmem:[#allocation2 + $0xbd0] sm:$0xff]
    %v405 = vld [vmem:[#allocation2 + $0xbd8] sm:$0xff]
    %v406 = vld [vmem:[#allocation2 + $0xbe0] sm:$0xff]
    %v407 = vld [vmem:[#allocation2 + $0xbe8] sm:$0xff]
    %v408 = vld [vmem:[#allocation2 + $0xbf0] sm:$0xff]
    %v409 = vld [vmem:[#allocation2 + $0xbf8] sm:$0xff]
    %v410 = vld [vmem:[#allocation2 + $0xc00] sm:$0xff]
    %v411 = vld [vmem:[#allocation2 + $0xc08] sm:$0xff]
    %v412 = vld [vmem:[#allocation2 + $0xc10] sm:$0xff]
    %v413 = vld [vmem:[#allocation2 + $0xc18] sm:$0xff]
    %v414 = vld [vmem:[#allocation2 + $0xc20] sm:$0xff]
    %v415 = vld [vmem:[#allocation2 + $0xc28] sm:$0xff]
    %v416 = vld [vmem:[#allocation2 + $0xc30] sm:$0xff]
    %v417 = vld [vmem:[#allocation2 + $0xc38] sm:$0xff]
    %v418 = vld [vmem:[#allocation2 + $0xc40] sm:$0xff]
    %v419 = vld [vmem:[#allocation2 + $0xc48] sm:$0xff]
    %v420 = vld [vmem:[#allocation2 + $0xc50] sm:$0xff]
    %v421 = vld [vmem:[#allocation2 + $0xc58] sm:$0xff]
    %v422 = vld [vmem:[#allocation2 + $0xc60] sm:$0xff]
    %v423 = vld [vmem:[#allocation2 + $0xc68] sm:$0xff]
    %v424 = vld [vmem:[#allocation2 + $0xc70] sm:$0xff]
    %v425 = vld [vmem:[#allocation2 + $0xc78] sm:$0xff]
    %v426 = vld [vmem:[#allocation2 + $0xc80] sm:$0xff]
    %v427 = vld [vmem:[#allocation2 + $0xc88] sm:$0xff]
    %v428 = vld [vmem:[#allocation2 + $0xc90] sm:$0xff]
    %v429 = vld [vmem:[#allocation2 + $0xc98] sm:$0xff]
    %v430 = vld [vmem:[#allocation2 + $0xca0] sm:$0xff]
    %v431 = vld [vmem:[#allocation2 + $0xca8] sm:$0xff]
    %v432 = vld [vmem:[#allocation2 + $0xcb0] sm:$0xff]
    %v433 = vld [vmem:[#allocation2 + $0xcb8] sm:$0xff]
    %v434 = vld [vmem:[#allocation2 + $0xcc0] sm:$0xff]
    %v435 = vld [vmem:[#allocation2 + $0xcc8] sm:$0xff]
    %v436 = vld [vmem:[#allocation2 + $0xcd0] sm:$0xff]
    %v437 = vld [vmem:[#allocation2 + $0xcd8] sm:$0xff]
    %v438 = vld [vmem:[#allocation2 + $0xce0] sm:$0xff]
    %v439 = vld [vmem:[#allocation2 + $0xce8] sm:$0xff]
    %v440 = vld [vmem:[#allocation2 + $0xcf0] sm:$0xff]
    %v441 = vld [vmem:[#allocation2 + $0xcf8] sm:$0xff]
    %v442 = vld [vmem:[#allocation2 + $0xd00] sm:$0xff]
    %v443 = vld [vmem:[#allocation2 + $0xd08] sm:$0xff]
    %v444 = vld [vmem:[#allocation2 + $0xd10] sm:$0xff]
    %v445 = vld [vmem:[#allocation2 + $0xd18] sm:$0xff]
    %v446 = vld [vmem:[#allocation2 + $0xd20] sm:$0xff]
    %v447 = vld [vmem:[#allocation2 + $0xd28] sm:$0xff]
    %v448 = vld [vmem:[#allocation2 + $0xd30] sm:$0xff]
    %v449 = vld [vmem:[#allocation2 + $0xd38] sm:$0xff]
    %v450 = vld [vmem:[#allocation2 + $0xd40] sm:$0xff]
    %v451 = vld [vmem:[#allocation2 + $0xd48] sm:$0xff]
    %v452 = vld [vmem:[#allocation2 + $0xd50] sm:$0xff]
    %v453 = vld [vmem:[#allocation2 + $0xd58] sm:$0xff]
    %v454 = vld [vmem:[#allocation2 + $0xd60] sm:$0xff]
    %v455 = vld [vmem:[#allocation2 + $0xd68] sm:$0xff]
    %v456 = vld [vmem:[#allocation2 + $0xd70] sm:$0xff]
    %v457 = vld [vmem:[#allocation2 + $0xd78] sm:$0xff]
    %v458 = vld [vmem:[#allocation2 + $0xd80] sm:$0xff]
    %v459 = vld [vmem:[#allocation2 + $0xd88] sm:$0xff]
    %v460 = vld [vmem:[#allocation2 + $0xd90] sm:$0xff]
    %v461 = vld [vmem:[#allocation2 + $0xd98] sm:$0xff]
    %v462 = vld [vmem:[#allocation2 + $0xda0] sm:$0xff]
    %v463 = vld [vmem:[#allocation2 + $0xda8] sm:$0xff]
    %v464 = vld [vmem:[#allocation2 + $0xdb0] sm:$0xff]
    %v465 = vld [vmem:[#allocation2 + $0xdb8] sm:$0xff]
    %v466 = vld [vmem:[#allocation2 + $0xdc0] sm:$0xff]
    %v467 = vld [vmem:[#allocation2 + $0xdc8] sm:$0xff]
    %v468 = vld [vmem:[#allocation2 + $0xdd0] sm:$0xff]
    %v469 = vld [vmem:[#allocation2 + $0xdd8] sm:$0xff]
    %v470 = vld [vmem:[#allocation2 + $0xde0] sm:$0xff]
    %v471 = vld [vmem:[#allocation2 + $0xde8] sm:$0xff]
    %v472 = vld [vmem:[#allocation2 + $0xdf0] sm:$0xff]
    %v473 = vld [vmem:[#allocation2 + $0xdf8] sm:$0xff]
    %v474 = vld [vmem:[#allocation2 + $0xe00] sm:$0xff]
    %v475 = vld [vmem:[#allocation2 + $0xe08] sm:$0xff]
    %v476 = vld [vmem:[#allocation2 + $0xe10] sm:$0xff]
    %v477 = vld [vmem:[#allocation2 + $0xe18] sm:$0xff]
    %v478 = vld [vmem:[#allocation2 + $0xe20] sm:$0xff]
    %v479 = vld [vmem:[#allocation2 + $0xe28] sm:$0xff]
    %v480 = vld [vmem:[#allocation2 + $0xe30] sm:$0xff]
    %v481 = vld [vmem:[#allocation2 + $0xe38] sm:$0xff]
    %v482 = vld [vmem:[#allocation2 + $0xe40] sm:$0xff]
    %v483 = vld [vmem:[#allocation2 + $0xe48] sm:$0xff]
    %v484 = vld [vmem:[#allocation2 + $0xe50] sm:$0xff]
    %v485 = vld [vmem:[#allocation2 + $0xe58] sm:$0xff]
    %v486 = vld [vmem:[#allocation2 + $0xe60] sm:$0xff]
    %v487 = vld [vmem:[#allocation2 + $0xe68] sm:$0xff]
    %v488 = vld [vmem:[#allocation2 + $0xe70] sm:$0xff]
    %v489 = vld [vmem:[#allocation2 + $0xe78] sm:$0xff]
    %v490 = vld [vmem:[#allocation2 + $0xe80] sm:$0xff]
    %v491 = vld [vmem:[#allocation2 + $0xe88] sm:$0xff]
    %v492 = vld [vmem:[#allocation2 + $0xe90] sm:$0xff]
    %v493 = vld [vmem:[#allocation2 + $0xe98] sm:$0xff]
    %v494 = vld [vmem:[#allocation2 + $0xea0] sm:$0xff]
    %v495 = vld [vmem:[#allocation2 + $0xea8] sm:$0xff]
    %v496 = vld [vmem:[#allocation2 + $0xeb0] sm:$0xff]
    %v497 = vld [vmem:[#allocation2 + $0xeb8] sm:$0xff]
    %v498 = vld [vmem:[#allocation2 + $0xec0] sm:$0xff]
    %v499 = vld [vmem:[#allocation2 + $0xec8] sm:$0xff]
    %v500 = vld [vmem:[#allocation2 + $0xed0] sm:$0xff]
    %v501 = vld [vmem:[#allocation2 + $0xed8] sm:$0xff]
    %v502 = vld [vmem:[#allocation2 + $0xee0] sm:$0xff]
    %v503 = vld [vmem:[#allocation2 + $0xee8] sm:$0xff]
    %v504 = vld [vmem:[#allocation2 + $0xef0] sm:$0xff]
    %v505 = vld [vmem:[#allocation2 + $0xef8] sm:$0xff]
    %v506 = vld [vmem:[#allocation2 + $0xf00] sm:$0xff]
    %v507 = vld [vmem:[#allocation2 + $0xf08] sm:$0xff]
    %v508 = vld [vmem:[#allocation2 + $0xf10] sm:$0xff]
    %v509 = vld [vmem:[#allocation2 + $0xf18] sm:$0xff]
    %v510 = vld [vmem:[#allocation2 + $0xf20] sm:$0xff]
    %v511 = vld [vmem:[#allocation2 + $0xf28] sm:$0xff]
    %v512 = vld [vmem:[#allocation2 + $0xf30] sm:$0xff]
    %v513 = vld [vmem:[#allocation2 + $0xf38] sm:$0xff]
    %v514 = vld [vmem:[#allocation2 + $0xf40] sm:$0xff]
    %v515 = vld [vmem:[#allocation2 + $0xf48] sm:$0xff]
    %v516 = vld [vmem:[#allocation2 + $0xf50] sm:$0xff]
    %v517 = vld [vmem:[#allocation2 + $0xf58] sm:$0xff]
    %v518 = vld [vmem:[#allocation2 + $0xf60] sm:$0xff]
    %v519 = vld [vmem:[#allocation2 + $0xf68] sm:$0xff]
    %v520 = vld [vmem:[#allocation2 + $0xf70] sm:$0xff]
    %v521 = vld [vmem:[#allocation2 + $0xf78] sm:$0xff]
    %v522 = vld [vmem:[#allocation2 + $0xf80] sm:$0xff]
    %v523 = vld [vmem:[#allocation2 + $0xf88] sm:$0xff]
    %v524 = vld [vmem:[#allocation2 + $0xf90] sm:$0xff]
    %v525 = vld [vmem:[#allocation2 + $0xf98] sm:$0xff]
    %v526 = vld [vmem:[#allocation2 + $0xfa0] sm:$0xff]
    %v527 = vld [vmem:[#allocation2 + $0xfa8] sm:$0xff]
    %v528 = vld [vmem:[#allocation2 + $0xfb0] sm:$0xff]
    %v529 = vld [vmem:[#allocation2 + $0xfb8] sm:$0xff]
    %v530 = vld [vmem:[#allocation2 + $0xfc0] sm:$0xff]
    %v531 = vld [vmem:[#allocation2 + $0xfc8] sm:$0xff]
    %v532 = vld [vmem:[#allocation2 + $0xfd0] sm:$0xff]
    %v533 = vld [vmem:[#allocation2 + $0xfd8] sm:$0xff]
    %v534 = vld [vmem:[#allocation2 + $0xfe0] sm:$0xff]
    %v535 = vld [vmem:[#allocation2 + $0xfe8] sm:$0xff]
    %v536 = vld [vmem:[#allocation2 + $0xff0] sm:$0xff]
    %v537 = vld [vmem:[#allocation2 + $0xff8] sm:$0xff]
    %v538 = vld [vmem:[%s1] sm:$0xff]
    %v539 = vld [vmem:[%s1 + $0x8] sm:$0xff]
    %v540 = vld [vmem:[%s1 + $0x10] sm:$0xff]
    %v541 = vld [vmem:[%s1 + $0x18] sm:$0xff]
    %v542 = vld [vmem:[%s1 + $0x20] sm:$0xff]
    %v543 = vld [vmem:[%s1 + $0x28] sm:$0xff]
    %v544 = vld [vmem:[%s1 + $0x30] sm:$0xff]
    %v545 = vld [vmem:[%s1 + $0x38] sm:$0xff]
    %v546 = vld [vmem:[%s1 + $0x40] sm:$0xff]
    %v547 = vld [vmem:[%s1 + $0x48] sm:$0xff]
    %v548 = vld [vmem:[%s1 + $0x50] sm:$0xff]
    %v549 = vld [vmem:[%s1 + $0x58] sm:$0xff]
    %v550 = vld [vmem:[%s1 + $0x60] sm:$0xff]
    %v551 = vld [vmem:[%s1 + $0x68] sm:$0xff]
    %v552 = vld [vmem:[%s1 + $0x70] sm:$0xff]
    %v553 = vld [vmem:[%s1 + $0x78] sm:$0xff]
    %v554 = vld [vmem:[%s1 + $0x80] sm:$0xff]
    %v555 = vld [vmem:[%s1 + $0x88] sm:$0xff]
    %v556 = vld [vmem:[%s1 + $0x90] sm:$0xff]
    %v557 = vld [vmem:[%s1 + $0x98] sm:$0xff]
    %v558 = vld [vmem:[%s1 + $0xa0] sm:$0xff]
    %v559 = vld [vmem:[%s1 + $0xa8] sm:$0xff]
    %v560 = vld [vmem:[%s1 + $0xb0] sm:$0xff]
    %v561 = vld [vmem:[%s1 + $0xb8] sm:$0xff]
    %v562 = vld [vmem:[%s1 + $0xc0] sm:$0xff]
    %v563 = vld [vmem:[%s1 + $0xc8] sm:$0xff]
    %v564 = vld [vmem:[%s1 + $0xd0] sm:$0xff]
    %v565 = vld [vmem:[%s1 + $0xd8] sm:$0xff]
    %v566 = vld [vmem:[%s1 + $0xe0] sm:$0xff]
    %v567 = vld [vmem:[%s1 + $0xe8] sm:$0xff]
    %v568 = vld [vmem:[%s1 + $0xf0] sm:$0xff]
    %v569 = vld [vmem:[%s1 + $0xf8] sm:$0xff]
    %v570 = vld [vmem:[%s1 + $0x100] sm:$0xff]
    %v571 = vld [vmem:[%s1 + $0x108] sm:$0xff]
    %v572 = vld [vmem:[%s1 + $0x110] sm:$0xff]
    %v573 = vld [vmem:[%s1 + $0x118] sm:$0xff]
    %v574 = vld [vmem:[%s1 + $0x120] sm:$0xff]
    %v575 = vld [vmem:[%s1 + $0x128] sm:$0xff]
    %v576 = vld [vmem:[%s1 + $0x130] sm:$0xff]
    %v577 = vld [vmem:[%s1 + $0x138] sm:$0xff]
    %v578 = vld [vmem:[%s1 + $0x140] sm:$0xff]
    %v579 = vld [vmem:[%s1 + $0x148] sm:$0xff]
    %v580 = vld [vmem:[%s1 + $0x150] sm:$0xff]
    %v581 = vld [vmem:[%s1 + $0x158] sm:$0xff]
    %v582 = vld [vmem:[%s1 + $0x160] sm:$0xff]
    %v583 = vld [vmem:[%s1 + $0x168] sm:$0xff]
    %v584 = vld [vmem:[%s1 + $0x170] sm:$0xff]
    %v585 = vld [vmem:[%s1 + $0x178] sm:$0xff]
    %v586 = vld [vmem:[%s1 + $0x180] sm:$0xff]
    %v587 = vld [vmem:[%s1 + $0x188] sm:$0xff]
    %v588 = vld [vmem:[%s1 + $0x190] sm:$0xff]
    %v589 = vld [vmem:[%s1 + $0x198] sm:$0xff]
    %v590 = vld [vmem:[%s1 + $0x1a0] sm:$0xff]
    %v591 = vld [vmem:[%s1 + $0x1a8] sm:$0xff]
    %v592 = vld [vmem:[%s1 + $0x1b0] sm:$0xff]
    %v593 = vld [vmem:[%s1 + $0x1b8] sm:$0xff]
    %v594 = vld [vmem:[%s1 + $0x1c0] sm:$0xff]
    %v595 = vld [vmem:[%s1 + $0x1c8] sm:$0xff]
    %v596 = vld [vmem:[%s1 + $0x1d0] sm:$0xff]
    %v597 = vld [vmem:[%s1 + $0x1d8] sm:$0xff]
    %v598 = vld [vmem:[%s1 + $0x1e0] sm:$0xff]
    %v599 = vld [vmem:[%s1 + $0x1e8] sm:$0xff]
    %v600 = vld [vmem:[%s1 + $0x1f0] sm:$0xff]
    %v601 = vld [vmem:[%s1 + $0x1f8] sm:$0xff]
    %v602 = vld [vmem:[%s1 + $0x200] sm:$0xff]
    %v603 = vld [vmem:[%s1 + $0x208] sm:$0xff]
    %v604 = vld [vmem:[%s1 + $0x210] sm:$0xff]
    %v605 = vld [vmem:[%s1 + $0x218] sm:$0xff]
    %v606 = vld [vmem:[%s1 + $0x220] sm:$0xff]
    %v607 = vld [vmem:[%s1 + $0x228] sm:$0xff]
    %v608 = vld [vmem:[%s1 + $0x230] sm:$0xff]
    %v609 = vld [vmem:[%s1 + $0x238] sm:$0xff]
    %v610 = vld [vmem:[%s1 + $0x240] sm:$0xff]
    %v611 = vld [vmem:[%s1 + $0x248] sm:$0xff]
    %v612 = vld [vmem:[%s1 + $0x250] sm:$0xff]
    %v613 = vld [vmem:[%s1 + $0x258] sm:$0xff]
    %v614 = vld [vmem:[%s1 + $0x260] sm:$0xff]
    %v615 = vld [vmem:[%s1 + $0x268] sm:$0xff]
    %v616 = vld [vmem:[%s1 + $0x270] sm:$0xff]
    %v617 = vld [vmem:[%s1 + $0x278] sm:$0xff]
    %v618 = vld [vmem:[%s1 + $0x280] sm:$0xff]
    %v619 = vld [vmem:[%s1 + $0x288] sm:$0xff]
    %v620 = vld [vmem:[%s1 + $0x290] sm:$0xff]
    %v621 = vld [vmem:[%s1 + $0x298] sm:$0xff]
    %v622 = vld [vmem:[%s1 + $0x2a0] sm:$0xff]
    %v623 = vld [vmem:[%s1 + $0x2a8] sm:$0xff]
    %v624 = vld [vmem:[%s1 + $0x2b0] sm:$0xff]
    %v625 = vld [vmem:[%s1 + $0x2b8] sm:$0xff]
    %v626 = vld [vmem:[%s1 + $0x2c0] sm:$0xff]
    %v627 = vld [vmem:[%s1 + $0x2c8] sm:$0xff]
    %v628 = vld [vmem:[%s1 + $0x2d0] sm:$0xff]
    %v629 = vld [vmem:[%s1 + $0x2d8] sm:$0xff]
    %v630 = vld [vmem:[%s1 + $0x2e0] sm:$0xff]
    %v631 = vld [vmem:[%s1 + $0x2e8] sm:$0xff]
    %v632 = vld [vmem:[%s1 + $0x2f0] sm:$0xff]
    %v633 = vld [vmem:[%s1 + $0x2f8] sm:$0xff]
    %v634 = vld [vmem:[%s1 + $0x300] sm:$0xff]
    %v635 = vld [vmem:[%s1 + $0x308] sm:$0xff]
    %v636 = vld [vmem:[%s1 + $0x310] sm:$0xff]
    %v637 = vld [vmem:[%s1 + $0x318] sm:$0xff]
    %v638 = vld [vmem:[%s1 + $0x320] sm:$0xff]
    %v639 = vld [vmem:[%s1 + $0x328] sm:$0xff]
    %v640 = vld [vmem:[%s1 + $0x330] sm:$0xff]
    %v641 = vld [vmem:[%s1 + $0x338] sm:$0xff]
    %v642 = vld [vmem:[%s1 + $0x340] sm:$0xff]
    %v643 = vld [vmem:[%s1 + $0x348] sm:$0xff]
    %v644 = vld [vmem:[%s1 + $0x350] sm:$0xff]
    %v645 = vld [vmem:[%s1 + $0x358] sm:$0xff]
    %v646 = vld [vmem:[%s1 + $0x360] sm:$0xff]
    %v647 = vld [vmem:[%s1 + $0x368] sm:$0xff]
    %v648 = vld [vmem:[%s1 + $0x370] sm:$0xff]
    %v649 = vld [vmem:[%s1 + $0x378] sm:$0xff]
    %v650 = vld [vmem:[%s1 + $0x380] sm:$0xff]
    %v651 = vld [vmem:[%s1 + $0x388] sm:$0xff]
    %v652 = vld [vmem:[%s1 + $0x390] sm:$0xff]
    %v653 = vld [vmem:[%s1 + $0x398] sm:$0xff]
    %v654 = vld [vmem:[%s1 + $0x3a0] sm:$0xff]
    %v655 = vld [vmem:[%s1 + $0x3a8] sm:$0xff]
    %v656 = vld [vmem:[%s1 + $0x3b0] sm:$0xff]
    %v657 = vld [vmem:[%s1 + $0x3b8] sm:$0xff]
    %v658 = vld [vmem:[%s1 + $0x3c0] sm:$0xff]
    %v659 = vld [vmem:[%s1 + $0x3c8] sm:$0xff]
    %v660 = vld [vmem:[%s1 + $0x3d0] sm:$0xff]
    %v661 = vld [vmem:[%s1 + $0x3d8] sm:$0xff]
    %v662 = vld [vmem:[%s1 + $0x3e0] sm:$0xff]
    %v663 = vld [vmem:[%s1 + $0x3e8] sm:$0xff]
    %v664 = vld [vmem:[%s1 + $0x3f0] sm:$0xff]
    %v665 = vld [vmem:[%s1 + $0x3f8] sm:$0xff]
    %v666 = vld [vmem:[%s1 + $0x400] sm:$0xff]
    %v667 = vld [vmem:[%s1 + $0x408] sm:$0xff]
    %v668 = vld [vmem:[%s1 + $0x410] sm:$0xff]
    %v669 = vld [vmem:[%s1 + $0x418] sm:$0xff]
    %v670 = vld [vmem:[%s1 + $0x420] sm:$0xff]
    %v671 = vld [vmem:[%s1 + $0x428] sm:$0xff]
    %v672 = vld [vmem:[%s1 + $0x430] sm:$0xff]
    %v673 = vld [vmem:[%s1 + $0x438] sm:$0xff]
    %v674 = vld [vmem:[%s1 + $0x440] sm:$0xff]
    %v675 = vld [vmem:[%s1 + $0x448] sm:$0xff]
    %v676 = vld [vmem:[%s1 + $0x450] sm:$0xff]
    %v677 = vld [vmem:[%s1 + $0x458] sm:$0xff]
    %v678 = vld [vmem:[%s1 + $0x460] sm:$0xff]
    %v679 = vld [vmem:[%s1 + $0x468] sm:$0xff]
    %v680 = vld [vmem:[%s1 + $0x470] sm:$0xff]
    %v681 = vld [vmem:[%s1 + $0x478] sm:$0xff]
    %v682 = vld [vmem:[%s1 + $0x480] sm:$0xff]
    %v683 = vld [vmem:[%s1 + $0x488] sm:$0xff]
    %v684 = vld [vmem:[%s1 + $0x490] sm:$0xff]
    %v685 = vld [vmem:[%s1 + $0x498] sm:$0xff]
    %v686 = vld [vmem:[%s1 + $0x4a0] sm:$0xff]
    %v687 = vld [vmem:[%s1 + $0x4a8] sm:$0xff]
    %v688 = vld [vmem:[%s1 + $0x4b0] sm:$0xff]
    %v689 = vld [vmem:[%s1 + $0x4b8] sm:$0xff]
    %v690 = vld [vmem:[%s1 + $0x4c0] sm:$0xff]
    %v691 = vld [vmem:[%s1 + $0x4c8] sm:$0xff]
    %v692 = vld [vmem:[%s1 + $0x4d0] sm:$0xff]
    %v693 = vld [vmem:[%s1 + $0x4d8] sm:$0xff]
    %v694 = vld [vmem:[%s1 + $0x4e0] sm:$0xff]
    %v695 = vld [vmem:[%s1 + $0x4e8] sm:$0xff]
    %v696 = vld [vmem:[%s1 + $0x4f0] sm:$0xff]
    %v697 = vld [vmem:[%s1 + $0x4f8] sm:$0xff]
    %v698 = vld [vmem:[%s1 + $0x500] sm:$0xff]
    %v699 = vld [vmem:[%s1 + $0x508] sm:$0xff]
    %v700 = vld [vmem:[%s1 + $0x510] sm:$0xff]
    %v701 = vld [vmem:[%s1 + $0x518] sm:$0xff]
    %v702 = vld [vmem:[%s1 + $0x520] sm:$0xff]
    %v703 = vld [vmem:[%s1 + $0x528] sm:$0xff]
    %v704 = vld [vmem:[%s1 + $0x530] sm:$0xff]
    %v705 = vld [vmem:[%s1 + $0x538] sm:$0xff]
    %v706 = vld [vmem:[%s1 + $0x540] sm:$0xff]
    %v707 = vld [vmem:[%s1 + $0x548] sm:$0xff]
    %v708 = vld [vmem:[%s1 + $0x550] sm:$0xff]
    %v709 = vld [vmem:[%s1 + $0x558] sm:$0xff]
    %v710 = vld [vmem:[%s1 + $0x560] sm:$0xff]
    %v711 = vld [vmem:[%s1 + $0x568] sm:$0xff]
    %v712 = vld [vmem:[%s1 + $0x570] sm:$0xff]
    %v713 = vld [vmem:[%s1 + $0x578] sm:$0xff]
    %v714 = vld [vmem:[%s1 + $0x580] sm:$0xff]
    %v715 = vld [vmem:[%s1 + $0x588] sm:$0xff]
    %v716 = vld [vmem:[%s1 + $0x590] sm:$0xff]
    %v717 = vld [vmem:[%s1 + $0x598] sm:$0xff]
    %v718 = vld [vmem:[%s1 + $0x5a0] sm:$0xff]
    %v719 = vld [vmem:[%s1 + $0x5a8] sm:$0xff]
    %v720 = vld [vmem:[%s1 + $0x5b0] sm:$0xff]
    %v721 = vld [vmem:[%s1 + $0x5b8] sm:$0xff]
    %v722 = vld [vmem:[%s1 + $0x5c0] sm:$0xff]
    %v723 = vld [vmem:[%s1 + $0x5c8] sm:$0xff]
    %v724 = vld [vmem:[%s1 + $0x5d0] sm:$0xff]
    %v725 = vld [vmem:[%s1 + $0x5d8] sm:$0xff]
    %v726 = vld [vmem:[%s1 + $0x5e0] sm:$0xff]
    %v727 = vld [vmem:[%s1 + $0x5e8] sm:$0xff]
    %v728 = vld [vmem:[%s1 + $0x5f0] sm:$0xff]
    %v729 = vld [vmem:[%s1 + $0x5f8] sm:$0xff]
    %v730 = vld [vmem:[%s1 + $0x600] sm:$0xff]
    %v731 = vld [vmem:[%s1 + $0x608] sm:$0xff]
    %v732 = vld [vmem:[%s1 + $0x610] sm:$0xff]
    %v733 = vld [vmem:[%s1 + $0x618] sm:$0xff]
    %v734 = vld [vmem:[%s1 + $0x620] sm:$0xff]
    %v735 = vld [vmem:[%s1 + $0x628] sm:$0xff]
    %v736 = vld [vmem:[%s1 + $0x630] sm:$0xff]
    %v737 = vld [vmem:[%s1 + $0x638] sm:$0xff]
    %v738 = vld [vmem:[%s1 + $0x640] sm:$0xff]
    %v739 = vld [vmem:[%s1 + $0x648] sm:$0xff]
    %v740 = vld [vmem:[%s1 + $0x650] sm:$0xff]
    %v741 = vld [vmem:[%s1 + $0x658] sm:$0xff]
    %v742 = vld [vmem:[%s1 + $0x660] sm:$0xff]
    %v743 = vld [vmem:[%s1 + $0x668] sm:$0xff]
    %v744 = vld [vmem:[%s1 + $0x670] sm:$0xff]
    %v745 = vld [vmem:[%s1 + $0x678] sm:$0xff]
    %v746 = vld [vmem:[%s1 + $0x680] sm:$0xff]
    %v747 = vld [vmem:[%s1 + $0x688] sm:$0xff]
    %v748 = vld [vmem:[%s1 + $0x690] sm:$0xff]
    %v749 = vld [vmem:[%s1 + $0x698] sm:$0xff]
    %v750 = vld [vmem:[%s1 + $0x6a0] sm:$0xff]
    %v751 = vld [vmem:[%s1 + $0x6a8] sm:$0xff]
    %v752 = vld [vmem:[%s1 + $0x6b0] sm:$0xff]
    %v753 = vld [vmem:[%s1 + $0x6b8] sm:$0xff]
    %v754 = vld [vmem:[%s1 + $0x6c0] sm:$0xff]
    %v755 = vld [vmem:[%s1 + $0x6c8] sm:$0xff]
    %v756 = vld [vmem:[%s1 + $0x6d0] sm:$0xff]
    %v757 = vld [vmem:[%s1 + $0x6d8] sm:$0xff]
    %v758 = vld [vmem:[%s1 + $0x6e0] sm:$0xff]
    %v759 = vld [vmem:[%s1 + $0x6e8] sm:$0xff]
    %v760 = vld [vmem:[%s1 + $0x6f0] sm:$0xff]
    %v761 = vld [vmem:[%s1 + $0x6f8] sm:$0xff]
    %v762 = vld [vmem:[%s1 + $0x700] sm:$0xff]
    %v763 = vld [vmem:[%s1 + $0x708] sm:$0xff]
    %v764 = vld [vmem:[%s1 + $0x710] sm:$0xff]
    %v765 = vld [vmem:[%s1 + $0x718] sm:$0xff]
    %v766 = vld [vmem:[%s1 + $0x720] sm:$0xff]
    %v767 = vld [vmem:[%s1 + $0x728] sm:$0xff]
    %v768 = vld [vmem:[%s1 + $0x730] sm:$0xff]
    %v769 = vld [vmem:[%s1 + $0x738] sm:$0xff]
    %v770 = vld [vmem:[%s1 + $0x740] sm:$0xff]
    %v771 = vld [vmem:[%s1 + $0x748] sm:$0xff]
    %v772 = vld [vmem:[%s1 + $0x750] sm:$0xff]
    %v773 = vld [vmem:[%s1 + $0x758] sm:$0xff]
    %v774 = vld [vmem:[%s1 + $0x760] sm:$0xff]
    %v775 = vld [vmem:[%s1 + $0x768] sm:$0xff]
    %v776 = vld [vmem:[%s1 + $0x770] sm:$0xff]
    %v777 = vld [vmem:[%s1 + $0x778] sm:$0xff]
    %v778 = vld [vmem:[%s1 + $0x780] sm:$0xff]
    %v779 = vld [vmem:[%s1 + $0x788] sm:$0xff]
    %v780 = vld [vmem:[%s1 + $0x790] sm:$0xff]
    %v781 = vld [vmem:[%s1 + $0x798] sm:$0xff]
    %v782 = vld [vmem:[%s1 + $0x7a0] sm:$0xff]
    %v783 = vld [vmem:[%s1 + $0x7a8] sm:$0xff]
    %v784 = vld [vmem:[%s1 + $0x7b0] sm:$0xff]
    %v785 = vld [vmem:[%s1 + $0x7b8] sm:$0xff]
    %v786 = vld [vmem:[%s1 + $0x7c0] sm:$0xff]
    %v787 = vld [vmem:[%s1 + $0x7c8] sm:$0xff]
    %v788 = vld [vmem:[%s1 + $0x7d0] sm:$0xff]
    %v789 = vld [vmem:[%s1 + $0x7d8] sm:$0xff]
    %v790 = vld [vmem:[%s1 + $0x7e0] sm:$0xff]
    %v791 = vld [vmem:[%s1 + $0x7e8] sm:$0xff]
    %v792 = vld [vmem:[%s1 + $0x7f0] sm:$0xff]
    %v793 = vld [vmem:[%s1 + $0x7f8] sm:$0xff]
    %v794 = vld [vmem:[%s1 + $0x800] sm:$0xff]
    %v795 = vld [vmem:[%s1 + $0x808] sm:$0xff]
    %v796 = vld [vmem:[%s1 + $0x810] sm:$0xff]
    %v797 = vld [vmem:[%s1 + $0x818] sm:$0xff]
    %v798 = vld [vmem:[%s1 + $0x820] sm:$0xff]
    %v799 = vld [vmem:[%s1 + $0x828] sm:$0xff]
    %v800 = vld [vmem:[%s1 + $0x830] sm:$0xff]
    %v801 = vld [vmem:[%s1 + $0x838] sm:$0xff]
    %v802 = vld [vmem:[%s1 + $0x840] sm:$0xff]
    %v803 = vld [vmem:[%s1 + $0x848] sm:$0xff]
    %v804 = vld [vmem:[%s1 + $0x850] sm:$0xff]
    %v805 = vld [vmem:[%s1 + $0x858] sm:$0xff]
    %v806 = vld [vmem:[%s1 + $0x860] sm:$0xff]
    %v807 = vld [vmem:[%s1 + $0x868] sm:$0xff]
    %v808 = vld [vmem:[%s1 + $0x870] sm:$0xff]
    %v809 = vld [vmem:[%s1 + $0x878] sm:$0xff]
    %v810 = vld [vmem:[%s1 + $0x880] sm:$0xff]
    %v811 = vld [vmem:[%s1 + $0x888] sm:$0xff]
    %v812 = vld [vmem:[%s1 + $0x890] sm:$0xff]
    %v813 = vld [vmem:[%s1 + $0x898] sm:$0xff]
    %v814 = vld [vmem:[%s1 + $0x8a0] sm:$0xff]
    %v815 = vld [vmem:[%s1 + $0x8a8] sm:$0xff]
    %v816 = vld [vmem:[%s1 + $0x8b0] sm:$0xff]
    %v817 = vld [vmem:[%s1 + $0x8b8] sm:$0xff]
    %v818 = vld [vmem:[%s1 + $0x8c0] sm:$0xff]
    %v819 = vld [vmem:[%s1 + $0x8c8] sm:$0xff]
    %v820 = vld [vmem:[%s1 + $0x8d0] sm:$0xff]
    %v821 = vld [vmem:[%s1 + $0x8d8] sm:$0xff]
    %v822 = vld [vmem:[%s1 + $0x8e0] sm:$0xff]
    %v823 = vld [vmem:[%s1 + $0x8e8] sm:$0xff]
    %v824 = vld [vmem:[%s1 + $0x8f0] sm:$0xff]
    %v825 = vld [vmem:[%s1 + $0x8f8] sm:$0xff]
    %v826 = vld [vmem:[%s1 + $0x900] sm:$0xff]
    %v827 = vld [vmem:[%s1 + $0x908] sm:$0xff]
    %v828 = vld [vmem:[%s1 + $0x910] sm:$0xff]
    %v829 = vld [vmem:[%s1 + $0x918] sm:$0xff]
    %v830 = vld [vmem:[%s1 + $0x920] sm:$0xff]
    %v831 = vld [vmem:[%s1 + $0x928] sm:$0xff]
    %v832 = vld [vmem:[%s1 + $0x930] sm:$0xff]
    %v833 = vld [vmem:[%s1 + $0x938] sm:$0xff]
    %v834 = vld [vmem:[%s1 + $0x940] sm:$0xff]
    %v835 = vld [vmem:[%s1 + $0x948] sm:$0xff]
    %v836 = vld [vmem:[%s1 + $0x950] sm:$0xff]
    %v837 = vld [vmem:[%s1 + $0x958] sm:$0xff]
    %v838 = vld [vmem:[%s1 + $0x960] sm:$0xff]
    %v839 = vld [vmem:[%s1 + $0x968] sm:$0xff]
    %v840 = vld [vmem:[%s1 + $0x970] sm:$0xff]
    %v841 = vld [vmem:[%s1 + $0x978] sm:$0xff]
    %v842 = vld [vmem:[%s1 + $0x980] sm:$0xff]
    %v843 = vld [vmem:[%s1 + $0x988] sm:$0xff]
    %v844 = vld [vmem:[%s1 + $0x990] sm:$0xff]
    %v845 = vld [vmem:[%s1 + $0x998] sm:$0xff]
    %v846 = vld [vmem:[%s1 + $0x9a0] sm:$0xff]
    %v847 = vld [vmem:[%s1 + $0x9a8] sm:$0xff]
    %v848 = vld [vmem:[%s1 + $0x9b0] sm:$0xff]
    %v849 = vld [vmem:[%s1 + $0x9b8] sm:$0xff]
    %v850 = vld [vmem:[%s1 + $0x9c0] sm:$0xff]
    %v851 = vld [vmem:[%s1 + $0x9c8] sm:$0xff]
    %v852 = vld [vmem:[%s1 + $0x9d0] sm:$0xff]
    %v853 = vld [vmem:[%s1 + $0x9d8] sm:$0xff]
    %v854 = vld [vmem:[%s1 + $0x9e0] sm:$0xff]
    %v855 = vld [vmem:[%s1 + $0x9e8] sm:$0xff]
    %v856 = vld [vmem:[%s1 + $0x9f0] sm:$0xff]
    %v857 = vld [vmem:[%s1 + $0x9f8] sm:$0xff]
    %v858 = vld [vmem:[%s1 + $0xa00] sm:$0xff]
    %v859 = vld [vmem:[%s1 + $0xa08] sm:$0xff]
    %v860 = vld [vmem:[%s1 + $0xa10] sm:$0xff]
    %v861 = vld [vmem:[%s1 + $0xa18] sm:$0xff]
    %v862 = vld [vmem:[%s1 + $0xa20] sm:$0xff]
    %v863 = vld [vmem:[%s1 + $0xa28] sm:$0xff]
    %v864 = vld [vmem:[%s1 + $0xa30] sm:$0xff]
    %v865 = vld [vmem:[%s1 + $0xa38] sm:$0xff]
    %v866 = vld [vmem:[%s1 + $0xa40] sm:$0xff]
    %v867 = vld [vmem:[%s1 + $0xa48] sm:$0xff]
    %v868 = vld [vmem:[%s1 + $0xa50] sm:$0xff]
    %v869 = vld [vmem:[%s1 + $0xa58] sm:$0xff]
    %v870 = vld [vmem:[%s1 + $0xa60] sm:$0xff]
    %v871 = vld [vmem:[%s1 + $0xa68] sm:$0xff]
    %v872 = vld [vmem:[%s1 + $0xa70] sm:$0xff]
    %v873 = vld [vmem:[%s1 + $0xa78] sm:$0xff]
    %v874 = vld [vmem:[%s1 + $0xa80] sm:$0xff]
    %v875 = vld [vmem:[%s1 + $0xa88] sm:$0xff]
    %v876 = vld [vmem:[%s1 + $0xa90] sm:$0xff]
    %v877 = vld [vmem:[%s1 + $0xa98] sm:$0xff]
    %v878 = vld [vmem:[%s1 + $0xaa0] sm:$0xff]
    %v879 = vld [vmem:[%s1 + $0xaa8] sm:$0xff]
    %v880 = vld [vmem:[%s1 + $0xab0] sm:$0xff]
    %v881 = vld [vmem:[%s1 + $0xab8] sm:$0xff]
    %v882 = vld [vmem:[%s1 + $0xac0] sm:$0xff]
    %v883 = vld [vmem:[%s1 + $0xac8] sm:$0xff]
    %v884 = vld [vmem:[%s1 + $0xad0] sm:$0xff]
    %v885 = vld [vmem:[%s1 + $0xad8] sm:$0xff]
    %v886 = vld [vmem:[%s1 + $0xae0] sm:$0xff]
    %v887 = vld [vmem:[%s1 + $0xae8] sm:$0xff]
    %v888 = vld [vmem:[%s1 + $0xaf0] sm:$0xff]
    %v889 = vld [vmem:[%s1 + $0xaf8] sm:$0xff]
    %v890 = vld [vmem:[%s1 + $0xb00] sm:$0xff]
    %v891 = vld [vmem:[%s1 + $0xb08] sm:$0xff]
    %v892 = vld [vmem:[%s1 + $0xb10] sm:$0xff]
    %v893 = vld [vmem:[%s1 + $0xb18] sm:$0xff]
    %v894 = vld [vmem:[%s1 + $0xb20] sm:$0xff]
    %v895 = vld [vmem:[%s1 + $0xb28] sm:$0xff]
    %v896 = vld [vmem:[%s1 + $0xb30] sm:$0xff]
    %v897 = vld [vmem:[%s1 + $0xb38] sm:$0xff]
    %v898 = vld [vmem:[%s1 + $0xb40] sm:$0xff]
    %v899 = vld [vmem:[%s1 + $0xb48] sm:$0xff]
    %v900 = vld [vmem:[%s1 + $0xb50] sm:$0xff]
    %v901 = vld [vmem:[%s1 + $0xb58] sm:$0xff]
    %v902 = vld [vmem:[%s1 + $0xb60] sm:$0xff]
    %v903 = vld [vmem:[%s1 + $0xb68] sm:$0xff]
    %v904 = vld [vmem:[%s1 + $0xb70] sm:$0xff]
    %v905 = vld [vmem:[%s1 + $0xb78] sm:$0xff]
    %v906 = vld [vmem:[%s1 + $0xb80] sm:$0xff]
    %v907 = vld [vmem:[%s1 + $0xb88] sm:$0xff]
    %v908 = vld [vmem:[%s1 + $0xb90] sm:$0xff]
    %v909 = vld [vmem:[%s1 + $0xb98] sm:$0xff]
    %v910 = vld [vmem:[%s1 + $0xba0] sm:$0xff]
    %v911 = vld [vmem:[%s1 + $0xba8] sm:$0xff]
    %v912 = vld [vmem:[%s1 + $0xbb0] sm:$0xff]
    %v913 = vld [vmem:[%s1 + $0xbb8] sm:$0xff]
    %v914 = vld [vmem:[%s1 + $0xbc0] sm:$0xff]
    %v915 = vld [vmem:[%s1 + $0xbc8] sm:$0xff]
    %v916 = vld [vmem:[%s1 + $0xbd0] sm:$0xff]
    %v917 = vld [vmem:[%s1 + $0xbd8] sm:$0xff]
    %v918 = vld [vmem:[%s1 + $0xbe0] sm:$0xff]
    %v919 = vld [vmem:[%s1 + $0xbe8] sm:$0xff]
    %v920 = vld [vmem:[%s1 + $0xbf0] sm:$0xff]
    %v921 = vld [vmem:[%s1 + $0xbf8] sm:$0xff]
    %v922 = vld [vmem:[%s1 + $0xc00] sm:$0xff]
    %v923 = vld [vmem:[%s1 + $0xc08] sm:$0xff]
    %v924 = vld [vmem:[%s1 + $0xc10] sm:$0xff]
    %v925 = vld [vmem:[%s1 + $0xc18] sm:$0xff]
    %v926 = vld [vmem:[%s1 + $0xc20] sm:$0xff]
    %v927 = vld [vmem:[%s1 + $0xc28] sm:$0xff]
    %v928 = vld [vmem:[%s1 + $0xc30] sm:$0xff]
    %v929 = vld [vmem:[%s1 + $0xc38] sm:$0xff]
    %v930 = vld [vmem:[%s1 + $0xc40] sm:$0xff]
    %v931 = vld [vmem:[%s1 + $0xc48] sm:$0xff]
    %v932 = vld [vmem:[%s1 + $0xc50] sm:$0xff]
    %v933 = vld [vmem:[%s1 + $0xc58] sm:$0xff]
    %v934 = vld [vmem:[%s1 + $0xc60] sm:$0xff]
    %v935 = vld [vmem:[%s1 + $0xc68] sm:$0xff]
    %v936 = vld [vmem:[%s1 + $0xc70] sm:$0xff]
    %v937 = vld [vmem:[%s1 + $0xc78] sm:$0xff]
    %v938 = vld [vmem:[%s1 + $0xc80] sm:$0xff]
    %v939 = vld [vmem:[%s1 + $0xc88] sm:$0xff]
    %v940 = vld [vmem:[%s1 + $0xc90] sm:$0xff]
    %v941 = vld [vmem:[%s1 + $0xc98] sm:$0xff]
    %v942 = vld [vmem:[%s1 + $0xca0] sm:$0xff]
    %v943 = vld [vmem:[%s1 + $0xca8] sm:$0xff]
    %v944 = vld [vmem:[%s1 + $0xcb0] sm:$0xff]
    %v945 = vld [vmem:[%s1 + $0xcb8] sm:$0xff]
    %v946 = vld [vmem:[%s1 + $0xcc0] sm:$0xff]
    %v947 = vld [vmem:[%s1 + $0xcc8] sm:$0xff]
    %v948 = vld [vmem:[%s1 + $0xcd0] sm:$0xff]
    %v949 = vld [vmem:[%s1 + $0xcd8] sm:$0xff]
    %v950 = vld [vmem:[%s1 + $0xce0] sm:$0xff]
    %v951 = vld [vmem:[%s1 + $0xce8] sm:$0xff]
    %v952 = vld [vmem:[%s1 + $0xcf0] sm:$0xff]
    %v953 = vld [vmem:[%s1 + $0xcf8] sm:$0xff]
    %v954 = vld [vmem:[%s1 + $0xd00] sm:$0xff]
    %v955 = vld [vmem:[%s1 + $0xd08] sm:$0xff]
    %v956 = vld [vmem:[%s1 + $0xd10] sm:$0xff]
    %v957 = vld [vmem:[%s1 + $0xd18] sm:$0xff]
    %v958 = vld [vmem:[%s1 + $0xd20] sm:$0xff]
    %v959 = vld [vmem:[%s1 + $0xd28] sm:$0xff]
    %v960 = vld [vmem:[%s1 + $0xd30] sm:$0xff]
    %v961 = vld [vmem:[%s1 + $0xd38] sm:$0xff]
    %v962 = vld [vmem:[%s1 + $0xd40] sm:$0xff]
    %v963 = vld [vmem:[%s1 + $0xd48] sm:$0xff]
    %v964 = vld [vmem:[%s1 + $0xd50] sm:$0xff]
    %v965 = vld [vmem:[%s1 + $0xd58] sm:$0xff]
    %v966 = vld [vmem:[%s1 + $0xd60] sm:$0xff]
    %v967 = vld [vmem:[%s1 + $0xd68] sm:$0xff]
    %v968 = vld [vmem:[%s1 + $0xd70] sm:$0xff]
    %v969 = vld [vmem:[%s1 + $0xd78] sm:$0xff]
    %v970 = vld [vmem:[%s1 + $0xd80] sm:$0xff]
    %v971 = vld [vmem:[%s1 + $0xd88] sm:$0xff]
    %v972 = vld [vmem:[%s1 + $0xd90] sm:$0xff]
    %v973 = vld [vmem:[%s1 + $0xd98] sm:$0xff]
    %v974 = vld [vmem:[%s1 + $0xda0] sm:$0xff]
    %v975 = vld [vmem:[%s1 + $0xda8] sm:$0xff]
    %v976 = vld [vmem:[%s1 + $0xdb0] sm:$0xff]
    %v977 = vld [vmem:[%s1 + $0xdb8] sm:$0xff]
    %v978 = vld [vmem:[%s1 + $0xdc0] sm:$0xff]
    %v979 = vld [vmem:[%s1 + $0xdc8] sm:$0xff]
    %v980 = vld [vmem:[%s1 + $0xdd0] sm:$0xff]
    %v981 = vld [vmem:[%s1 + $0xdd8] sm:$0xff]
    %v982 = vld [vmem:[%s1 + $0xde0] sm:$0xff]
    %v983 = vld [vmem:[%s1 + $0xde8] sm:$0xff]
    %v984 = vld [vmem:[%s1 + $0xdf0] sm:$0xff]
    %v985 = vld [vmem:[%s1 + $0xdf8] sm:$0xff]
    %v986 = vld [vmem:[%s1 + $0xe00] sm:$0xff]
    %v987 = vld [vmem:[%s1 + $0xe08] sm:$0xff]
    %v988 = vld [vmem:[%s1 + $0xe10] sm:$0xff]
    %v989 = vld [vmem:[%s1 + $0xe18] sm:$0xff]
    %v990 = vld [vmem:[%s1 + $0xe20] sm:$0xff]
    %v991 = vld [vmem:[%s1 + $0xe28] sm:$0xff]
    %v992 = vld [vmem:[%s1 + $0xe30] sm:$0xff]
    %v993 = vld [vmem:[%s1 + $0xe38] sm:$0xff]
    %v994 = vld [vmem:[%s1 + $0xe40] sm:$0xff]
    %v995 = vld [vmem:[%s1 + $0xe48] sm:$0xff]
    %v996 = vld [vmem:[%s1 + $0xe50] sm:$0xff]
    %v997 = vld [vmem:[%s1 + $0xe58] sm:$0xff]
    %v998 = vld [vmem:[%s1 + $0xe60] sm:$0xff]
    %v999 = vld [vmem:[%s1 + $0xe68] sm:$0xff]
    %v1000 = vld [vmem:[%s1 + $0xe70] sm:$0xff]
    %v1001 = vld [vmem:[%s1 + $0xe78] sm:$0xff]
    %v1002 = vld [vmem:[%s1 + $0xe80] sm:$0xff]
    %v1003 = vld [vmem:[%s1 + $0xe88] sm:$0xff]
    %v1004 = vld [vmem:[%s1 + $0xe90] sm:$0xff]
    %v1005 = vld [vmem:[%s1 + $0xe98] sm:$0xff]
    %v1006 = vld [vmem:[%s1 + $0xea0] sm:$0xff]
    %v1007 = vld [vmem:[%s1 + $0xea8] sm:$0xff]
    %v1008 = vld [vmem:[%s1 + $0xeb0] sm:$0xff]
    %v1009 = vld [vmem:[%s1 + $0xeb8] sm:$0xff]
    %v1010 = vld [vmem:[%s1 + $0xec0] sm:$0xff]
    %v1011 = vld [vmem:[%s1 + $0xec8] sm:$0xff]
    %v1012 = vld [vmem:[%s1 + $0xed0] sm:$0xff]
    %v1013 = vld [vmem:[%s1 + $0xed8] sm:$0xff]
    %v1014 = vld [vmem:[%s1 + $0xee0] sm:$0xff]
    %v1015 = vld [vmem:[%s1 + $0xee8] sm:$0xff]
    %v1016 = vld [vmem:[%s1 + $0xef0] sm:$0xff]
    %v1017 = vld [vmem:[%s1 + $0xef8] sm:$0xff]
    %v1018 = vld [vmem:[%s1 + $0xf00] sm:$0xff]
    %v1019 = vld [vmem:[%s1 + $0xf08] sm:$0xff]
    %v1020 = vld [vmem:[%s1 + $0xf10] sm:$0xff]
    %v1021 = vld [vmem:[%s1 + $0xf18] sm:$0xff]
    %v1022 = vld [vmem:[%s1 + $0xf20] sm:$0xff]
    %v1023 = vld [vmem:[%s1 + $0xf28] sm:$0xff]
    %v1024 = vld [vmem:[%s1 + $0xf30] sm:$0xff]
    %v1025 = vld [vmem:[%s1 + $0xf38] sm:$0xff]
    %v1026 = vld [vmem:[%s1 + $0xf40] sm:$0xff]
    %v1027 = vld [vmem:[%s1 + $0xf48] sm:$0xff]
    %v1028 = vld [vmem:[%s1 + $0xf50] sm:$0xff]
    %v1029 = vld [vmem:[%s1 + $0xf58] sm:$0xff]
    %v1030 = vld [vmem:[%s1 + $0xf60] sm:$0xff]
    %v1031 = vld [vmem:[%s1 + $0xf68] sm:$0xff]
    %v1032 = vld [vmem:[%s1 + $0xf70] sm:$0xff]
    %v1033 = vld [vmem:[%s1 + $0xf78] sm:$0xff]
    %v1034 = vld [vmem:[%s1 + $0xf80] sm:$0xff]
    %v1035 = vld [vmem:[%s1 + $0xf88] sm:$0xff]
    %v1036 = vld [vmem:[%s1 + $0xf90] sm:$0xff]
    %v1037 = vld [vmem:[%s1 + $0xf98] sm:$0xff]
    %v1038 = vld [vmem:[%s1 + $0xfa0] sm:$0xff]
    %v1039 = vld [vmem:[%s1 + $0xfa8] sm:$0xff]
    %v1040 = vld [vmem:[%s1 + $0xfb0] sm:$0xff]
    %v1041 = vld [vmem:[%s1 + $0xfb8] sm:$0xff]
    %v1042 = vld [vmem:[%s1 + $0xfc0] sm:$0xff]
    %v1043 = vld [vmem:[%s1 + $0xfc8] sm:$0xff]
    %v1044 = vld [vmem:[%s1 + $0xfd0] sm:$0xff]
    %v1045 = vld [vmem:[%s1 + $0xfd8] sm:$0xff]
    %v1046 = vld [vmem:[%s1 + $0xfe0] sm:$0xff]
    %v1047 = vld [vmem:[%s1 + $0xfe8] sm:$0xff]
    %v1048 = vld [vmem:[%s1 + $0xff0] sm:$0xff]
    %v1049 = vld [vmem:[%s1 + $0xff8] sm:$0xff]
    %v1050 = vmul.f32 %v26, %v538
    %v1051 = vmul.f32 %v27, %v539
    %v1052 = vmul.f32 %v28, %v540
    %v1053 = vmul.f32 %v29, %v541
    %v1054 = vmul.f32 %v30, %v542
    %v1055 = vmul.f32 %v31, %v543
    %v1056 = vmul.f32 %v32, %v544
    %v1057 = vmul.f32 %v33, %v545
    %v1058 = vmul.f32 %v34, %v546
    %v1059 = vmul.f32 %v35, %v547
    %v1060 = vmul.f32 %v36, %v548
    %v1061 = vmul.f32 %v37, %v549
    %v1062 = vmul.f32 %v38, %v550
    %v1063 = vmul.f32 %v39, %v551
    %v1064 = vmul.f32 %v40, %v552
    %v1065 = vmul.f32 %v41, %v553
    %v1066 = vmul.f32 %v42, %v554
    %v1067 = vmul.f32 %v43, %v555
    %v1068 = vmul.f32 %v44, %v556
    %v1069 = vmul.f32 %v45, %v557
    %v1070 = vmul.f32 %v46, %v558
    %v1071 = vmul.f32 %v47, %v559
    %v1072 = vmul.f32 %v48, %v560
    %v1073 = vmul.f32 %v49, %v561
    %v1074 = vmul.f32 %v50, %v562
    %v1075 = vmul.f32 %v51, %v563
    %v1076 = vmul.f32 %v52, %v564
    %v1077 = vmul.f32 %v53, %v565
    %v1078 = vmul.f32 %v54, %v566
    %v1079 = vmul.f32 %v55, %v567
    %v1080 = vmul.f32 %v56, %v568
    %v1081 = vmul.f32 %v57, %v569
    %v1082 = vmul.f32 %v58, %v570
    %v1083 = vmul.f32 %v59, %v571
    %v1084 = vmul.f32 %v60, %v572
    %v1085 = vmul.f32 %v61, %v573
    %v1086 = vmul.f32 %v62, %v574
    %v1087 = vmul.f32 %v63, %v575
    %v1088 = vmul.f32 %v64, %v576
    %v1089 = vmul.f32 %v65, %v577
    %v1090 = vmul.f32 %v66, %v578
    %v1091 = vmul.f32 %v67, %v579
    %v1092 = vmul.f32 %v68, %v580
    %v1093 = vmul.f32 %v69, %v581
    %v1094 = vmul.f32 %v70, %v582
    %v1095 = vmul.f32 %v71, %v583
    %v1096 = vmul.f32 %v72, %v584
    %v1097 = vmul.f32 %v73, %v585
    %v1098 = vmul.f32 %v74, %v586
    %v1099 = vmul.f32 %v75, %v587
    %v1100 = vmul.f32 %v76, %v588
    %v1101 = vmul.f32 %v77, %v589
    %v1102 = vmul.f32 %v78, %v590
    %v1103 = vmul.f32 %v79, %v591
    %v1104 = vmul.f32 %v80, %v592
    %v1105 = vmul.f32 %v81, %v593
    %v1106 = vmul.f32 %v82, %v594
    %v1107 = vmul.f32 %v83, %v595
    %v1108 = vmul.f32 %v84, %v596
    %v1109 = vmul.f32 %v85, %v597
    %v1110 = vmul.f32 %v86, %v598
    %v1111 = vmul.f32 %v87, %v599
    %v1112 = vmul.f32 %v88, %v600
    %v1113 = vmul.f32 %v89, %v601
    %v1114 = vmul.f32 %v90, %v602
    %v1115 = vmul.f32 %v91, %v603
    %v1116 = vmul.f32 %v92, %v604
    %v1117 = vmul.f32 %v93, %v605
    %v1118 = vmul.f32 %v94, %v606
    %v1119 = vmul.f32 %v95, %v607
    %v1120 = vmul.f32 %v96, %v608
    %v1121 = vmul.f32 %v97, %v609
    %v1122 = vmul.f32 %v98, %v610
    %v1123 = vmul.f32 %v99, %v611
    %v1124 = vmul.f32 %v100, %v612
    %v1125 = vmul.f32 %v101, %v613
    %v1126 = vmul.f32 %v102, %v614
    %v1127 = vmul.f32 %v103, %v615
    %v1128 = vmul.f32 %v104, %v616
    %v1129 = vmul.f32 %v105, %v617
    %v1130 = vmul.f32 %v106, %v618
    %v1131 = vmul.f32 %v107, %v619
    %v1132 = vmul.f32 %v108, %v620
    %v1133 = vmul.f32 %v109, %v621
    %v1134 = vmul.f32 %v110, %v622
    %v1135 = vmul.f32 %v111, %v623
    %v1136 = vmul.f32 %v112, %v624
    %v1137 = vmul.f32 %v113, %v625
    %v1138 = vmul.f32 %v114, %v626
    %v1139 = vmul.f32 %v115, %v627
    %v1140 = vmul.f32 %v116, %v628
    %v1141 = vmul.f32 %v117, %v629
    %v1142 = vmul.f32 %v118, %v630
    %v1143 = vmul.f32 %v119, %v631
    %v1144 = vmul.f32 %v120, %v632
    %v1145 = vmul.f32 %v121, %v633
    %v1146 = vmul.f32 %v122, %v634
    %v1147 = vmul.f32 %v123, %v635
    %v1148 = vmul.f32 %v124, %v636
    %v1149 = vmul.f32 %v125, %v637
    %v1150 = vmul.f32 %v126, %v638
    %v1151 = vmul.f32 %v127, %v639
    %v1152 = vmul.f32 %v128, %v640
    %v1153 = vmul.f32 %v129, %v641
    %v1154 = vmul.f32 %v130, %v642
    %v1155 = vmul.f32 %v131, %v643
    %v1156 = vmul.f32 %v132, %v644
    %v1157 = vmul.f32 %v133, %v645
    %v1158 = vmul.f32 %v134, %v646
    %v1159 = vmul.f32 %v135, %v647
    %v1160 = vmul.f32 %v136, %v648
    %v1161 = vmul.f32 %v137, %v649
    %v1162 = vmul.f32 %v138, %v650
    %v1163 = vmul.f32 %v139, %v651
    %v1164 = vmul.f32 %v140, %v652
    %v1165 = vmul.f32 %v141, %v653
    %v1166 = vmul.f32 %v142, %v654
    %v1167 = vmul.f32 %v143, %v655
    %v1168 = vmul.f32 %v144, %v656
    %v1169 = vmul.f32 %v145, %v657
    %v1170 = vmul.f32 %v146, %v658
    %v1171 = vmul.f32 %v147, %v659
    %v1172 = vmul.f32 %v148, %v660
    %v1173 = vmul.f32 %v149, %v661
    %v1174 = vmul.f32 %v150, %v662
    %v1175 = vmul.f32 %v151, %v663
    %v1176 = vmul.f32 %v152, %v664
    %v1177 = vmul.f32 %v153, %v665
    %v1178 = vmul.f32 %v154, %v666
    %v1179 = vmul.f32 %v155, %v667
    %v1180 = vmul.f32 %v156, %v668
    %v1181 = vmul.f32 %v157, %v669
    %v1182 = vmul.f32 %v158, %v670
    %v1183 = vmul.f32 %v159, %v671
    %v1184 = vmul.f32 %v160, %v672
    %v1185 = vmul.f32 %v161, %v673
    %v1186 = vmul.f32 %v162, %v674
    %v1187 = vmul.f32 %v163, %v675
    %v1188 = vmul.f32 %v164, %v676
    %v1189 = vmul.f32 %v165, %v677
    %v1190 = vmul.f32 %v166, %v678
    %v1191 = vmul.f32 %v167, %v679
    %v1192 = vmul.f32 %v168, %v680
    %v1193 = vmul.f32 %v169, %v681
    %v1194 = vmul.f32 %v170, %v682
    %v1195 = vmul.f32 %v171, %v683
    %v1196 = vmul.f32 %v172, %v684
    %v1197 = vmul.f32 %v173, %v685
    %v1198 = vmul.f32 %v174, %v686
    %v1199 = vmul.f32 %v175, %v687
    %v1200 = vmul.f32 %v176, %v688
    %v1201 = vmul.f32 %v177, %v689
    %v1202 = vmul.f32 %v178, %v690
    %v1203 = vmul.f32 %v179, %v691
    %v1204 = vmul.f32 %v180, %v692
    %v1205 = vmul.f32 %v181, %v693
    %v1206 = vmul.f32 %v182, %v694
    %v1207 = vmul.f32 %v183, %v695
    %v1208 = vmul.f32 %v184, %v696
    %v1209 = vmul.f32 %v185, %v697
    %v1210 = vmul.f32 %v186, %v698
    %v1211 = vmul.f32 %v187, %v699
    %v1212 = vmul.f32 %v188, %v700
    %v1213 = vmul.f32 %v189, %v701
    %v1214 = vmul.f32 %v190, %v702
    %v1215 = vmul.f32 %v191, %v703
    %v1216 = vmul.f32 %v192, %v704
    %v1217 = vmul.f32 %v193, %v705
    %v1218 = vmul.f32 %v194, %v706
    %v1219 = vmul.f32 %v195, %v707
    %v1220 = vmul.f32 %v196, %v708
    %v1221 = vmul.f32 %v197, %v709
    %v1222 = vmul.f32 %v198, %v710
    %v1223 = vmul.f32 %v199, %v711
    %v1224 = vmul.f32 %v200, %v712
    %v1225 = vmul.f32 %v201, %v713
    %v1226 = vmul.f32 %v202, %v714
    %v1227 = vmul.f32 %v203, %v715
    %v1228 = vmul.f32 %v204, %v716
    %v1229 = vmul.f32 %v205, %v717
    %v1230 = vmul.f32 %v206, %v718
    %v1231 = vmul.f32 %v207, %v719
    %v1232 = vmul.f32 %v208, %v720
    %v1233 = vmul.f32 %v209, %v721
    %v1234 = vmul.f32 %v210, %v722
    %v1235 = vmul.f32 %v211, %v723
    %v1236 = vmul.f32 %v212, %v724
    %v1237 = vmul.f32 %v213, %v725
    %v1238 = vmul.f32 %v214, %v726
    %v1239 = vmul.f32 %v215, %v727
    %v1240 = vmul.f32 %v216, %v728
    %v1241 = vmul.f32 %v217, %v729
    %v1242 = vmul.f32 %v218, %v730
    %v1243 = vmul.f32 %v219, %v731
    %v1244 = vmul.f32 %v220, %v732
    %v1245 = vmul.f32 %v221, %v733
    %v1246 = vmul.f32 %v222, %v734
    %v1247 = vmul.f32 %v223, %v735
    %v1248 = vmul.f32 %v224, %v736
    %v1249 = vmul.f32 %v225, %v737
    %v1250 = vmul.f32 %v226, %v738
    %v1251 = vmul.f32 %v227, %v739
    %v1252 = vmul.f32 %v228, %v740
    %v1253 = vmul.f32 %v229, %v741
    %v1254 = vmul.f32 %v230, %v742
    %v1255 = vmul.f32 %v231, %v743
    %v1256 = vmul.f32 %v232, %v744
    %v1257 = vmul.f32 %v233, %v745
    %v1258 = vmul.f32 %v234, %v746
    %v1259 = vmul.f32 %v235, %v747
    %v1260 = vmul.f32 %v236, %v748
    %v1261 = vmul.f32 %v237, %v749
    %v1262 = vmul.f32 %v238, %v750
    %v1263 = vmul.f32 %v239, %v751
    %v1264 = vmul.f32 %v240, %v752
    %v1265 = vmul.f32 %v241, %v753
    %v1266 = vmul.f32 %v242, %v754
    %v1267 = vmul.f32 %v243, %v755
    %v1268 = vmul.f32 %v244, %v756
    %v1269 = vmul.f32 %v245, %v757
    %v1270 = vmul.f32 %v246, %v758
    %v1271 = vmul.f32 %v247, %v759
    %v1272 = vmul.f32 %v248, %v760
    %v1273 = vmul.f32 %v249, %v761
    %v1274 = vmul.f32 %v250, %v762
    %v1275 = vmul.f32 %v251, %v763
    %v1276 = vmul.f32 %v252, %v764
    %v1277 = vmul.f32 %v253, %v765
    %v1278 = vmul.f32 %v254, %v766
    %v1279 = vmul.f32 %v255, %v767
    %v1280 = vmul.f32 %v256, %v768
    %v1281 = vmul.f32 %v257, %v769
    %v1282 = vmul.f32 %v258, %v770
    %v1283 = vmul.f32 %v259, %v771
    %v1284 = vmul.f32 %v260, %v772
    %v1285 = vmul.f32 %v261, %v773
    %v1286 = vmul.f32 %v262, %v774
    %v1287 = vmul.f32 %v263, %v775
    %v1288 = vmul.f32 %v264, %v776
    %v1289 = vmul.f32 %v265, %v777
    %v1290 = vmul.f32 %v266, %v778
    %v1291 = vmul.f32 %v267, %v779
    %v1292 = vmul.f32 %v268, %v780
    %v1293 = vmul.f32 %v269, %v781
    %v1294 = vmul.f32 %v270, %v782
    %v1295 = vmul.f32 %v271, %v783
    %v1296 = vmul.f32 %v272, %v784
    %v1297 = vmul.f32 %v273, %v785
    %v1298 = vmul.f32 %v274, %v786
    %v1299 = vmul.f32 %v275, %v787
    %v1300 = vmul.f32 %v276, %v788
    %v1301 = vmul.f32 %v277, %v789
    %v1302 = vmul.f32 %v278, %v790
    %v1303 = vmul.f32 %v279, %v791
    %v1304 = vmul.f32 %v280, %v792
    %v1305 = vmul.f32 %v281, %v793
    %v1306 = vmul.f32 %v282, %v794
    %v1307 = vmul.f32 %v283, %v795
    %v1308 = vmul.f32 %v284, %v796
    %v1309 = vmul.f32 %v285, %v797
    %v1310 = vmul.f32 %v286, %v798
    %v1311 = vmul.f32 %v287, %v799
    %v1312 = vmul.f32 %v288, %v800
    %v1313 = vmul.f32 %v289, %v801
    %v1314 = vmul.f32 %v290, %v802
    %v1315 = vmul.f32 %v291, %v803
    %v1316 = vmul.f32 %v292, %v804
    %v1317 = vmul.f32 %v293, %v805
    %v1318 = vmul.f32 %v294, %v806
    %v1319 = vmul.f32 %v295, %v807
    %v1320 = vmul.f32 %v296, %v808
    %v1321 = vmul.f32 %v297, %v809
    %v1322 = vmul.f32 %v298, %v810
    %v1323 = vmul.f32 %v299, %v811
    %v1324 = vmul.f32 %v300, %v812
    %v1325 = vmul.f32 %v301, %v813
    %v1326 = vmul.f32 %v302, %v814
    %v1327 = vmul.f32 %v303, %v815
    %v1328 = vmul.f32 %v304, %v816
    %v1329 = vmul.f32 %v305, %v817
    %v1330 = vmul.f32 %v306, %v818
    %v1331 = vmul.f32 %v307, %v819
    %v1332 = vmul.f32 %v308, %v820
    %v1333 = vmul.f32 %v309, %v821
    %v1334 = vmul.f32 %v310, %v822
    %v1335 = vmul.f32 %v311, %v823
    %v1336 = vmul.f32 %v312, %v824
    %v1337 = vmul.f32 %v313, %v825
    %v1338 = vmul.f32 %v314, %v826
    %v1339 = vmul.f32 %v315, %v827
    %v1340 = vmul.f32 %v316, %v828
    %v1341 = vmul.f32 %v317, %v829
    %v1342 = vmul.f32 %v318, %v830
    %v1343 = vmul.f32 %v319, %v831
    %v1344 = vmul.f32 %v320, %v832
    %v1345 = vmul.f32 %v321, %v833
    %v1346 = vmul.f32 %v322, %v834
    %v1347 = vmul.f32 %v323, %v835
    %v1348 = vmul.f32 %v324, %v836
    %v1349 = vmul.f32 %v325, %v837
    %v1350 = vmul.f32 %v326, %v838
    %v1351 = vmul.f32 %v327, %v839
    %v1352 = vmul.f32 %v328, %v840
    %v1353 = vmul.f32 %v329, %v841
    %v1354 = vmul.f32 %v330, %v842
    %v1355 = vmul.f32 %v331, %v843
    %v1356 = vmul.f32 %v332, %v844
    %v1357 = vmul.f32 %v333, %v845
    %v1358 = vmul.f32 %v334, %v846
    %v1359 = vmul.f32 %v335, %v847
    %v1360 = vmul.f32 %v336, %v848
    %v1361 = vmul.f32 %v337, %v849
    %v1362 = vmul.f32 %v338, %v850
    %v1363 = vmul.f32 %v339, %v851
    %v1364 = vmul.f32 %v340, %v852
    %v1365 = vmul.f32 %v341, %v853
    %v1366 = vmul.f32 %v342, %v854
    %v1367 = vmul.f32 %v343, %v855
    %v1368 = vmul.f32 %v344, %v856
    %v1369 = vmul.f32 %v345, %v857
    %v1370 = vmul.f32 %v346, %v858
    %v1371 = vmul.f32 %v347, %v859
    %v1372 = vmul.f32 %v348, %v860
    %v1373 = vmul.f32 %v349, %v861
    %v1374 = vmul.f32 %v350, %v862
    %v1375 = vmul.f32 %v351, %v863
    %v1376 = vmul.f32 %v352, %v864
    %v1377 = vmul.f32 %v353, %v865
    %v1378 = vmul.f32 %v354, %v866
    %v1379 = vmul.f32 %v355, %v867
    %v1380 = vmul.f32 %v356, %v868
    %v1381 = vmul.f32 %v357, %v869
    %v1382 = vmul.f32 %v358, %v870
    %v1383 = vmul.f32 %v359, %v871
    %v1384 = vmul.f32 %v360, %v872
    %v1385 = vmul.f32 %v361, %v873
    %v1386 = vmul.f32 %v362, %v874
    %v1387 = vmul.f32 %v363, %v875
    %v1388 = vmul.f32 %v364, %v876
    %v1389 = vmul.f32 %v365, %v877
    %v1390 = vmul.f32 %v366, %v878
    %v1391 = vmul.f32 %v367, %v879
    %v1392 = vmul.f32 %v368, %v880
    %v1393 = vmul.f32 %v369, %v881
    %v1394 = vmul.f32 %v370, %v882
    %v1395 = vmul.f32 %v371, %v883
    %v1396 = vmul.f32 %v372, %v884
    %v1397 = vmul.f32 %v373, %v885
    %v1398 = vmul.f32 %v374, %v886
    %v1399 = vmul.f32 %v375, %v887
    %v1400 = vmul.f32 %v376, %v888
    %v1401 = vmul.f32 %v377, %v889
    %v1402 = vmul.f32 %v378, %v890
    %v1403 = vmul.f32 %v379, %v891
    %v1404 = vmul.f32 %v380, %v892
    %v1405 = vmul.f32 %v381, %v893
    %v1406 = vmul.f32 %v382, %v894
    %v1407 = vmul.f32 %v383, %v895
    %v1408 = vmul.f32 %v384, %v896
    %v1409 = vmul.f32 %v385, %v897
    %v1410 = vmul.f32 %v386, %v898
    %v1411 = vmul.f32 %v387, %v899
    %v1412 = vmul.f32 %v388, %v900
    %v1413 = vmul.f32 %v389, %v901
    %v1414 = vmul.f32 %v390, %v902
    %v1415 = vmul.f32 %v391, %v903
    %v1416 = vmul.f32 %v392, %v904
    %v1417 = vmul.f32 %v393, %v905
    %v1418 = vmul.f32 %v394, %v906
    %v1419 = vmul.f32 %v395, %v907
    %v1420 = vmul.f32 %v396, %v908
    %v1421 = vmul.f32 %v397, %v909
    %v1422 = vmul.f32 %v398, %v910
    %v1423 = vmul.f32 %v399, %v911
    %v1424 = vmul.f32 %v400, %v912
    %v1425 = vmul.f32 %v401, %v913
    %v1426 = vmul.f32 %v402, %v914
    %v1427 = vmul.f32 %v403, %v915
    %v1428 = vmul.f32 %v404, %v916
    %v1429 = vmul.f32 %v405, %v917
    %v1430 = vmul.f32 %v406, %v918
    %v1431 = vmul.f32 %v407, %v919
    %v1432 = vmul.f32 %v408, %v920
    %v1433 = vmul.f32 %v409, %v921
    %v1434 = vmul.f32 %v410, %v922
    %v1435 = vmul.f32 %v411, %v923
    %v1436 = vmul.f32 %v412, %v924
    %v1437 = vmul.f32 %v413, %v925
    %v1438 = vmul.f32 %v414, %v926
    %v1439 = vmul.f32 %v415, %v927
    %v1440 = vmul.f32 %v416, %v928
    %v1441 = vmul.f32 %v417, %v929
    %v1442 = vmul.f32 %v418, %v930
    %v1443 = vmul.f32 %v419, %v931
    %v1444 = vmul.f32 %v420, %v932
    %v1445 = vmul.f32 %v421, %v933
    %v1446 = vmul.f32 %v422, %v934
    %v1447 = vmul.f32 %v423, %v935
    %v1448 = vmul.f32 %v424, %v936
    %v1449 = vmul.f32 %v425, %v937
    %v1450 = vmul.f32 %v426, %v938
    %v1451 = vmul.f32 %v427, %v939
    %v1452 = vmul.f32 %v428, %v940
    %v1453 = vmul.f32 %v429, %v941
    %v1454 = vmul.f32 %v430, %v942
    %v1455 = vmul.f32 %v431, %v943
    %v1456 = vmul.f32 %v432, %v944
    %v1457 = vmul.f32 %v433, %v945
    %v1458 = vmul.f32 %v434, %v946
    %v1459 = vmul.f32 %v435, %v947
    %v1460 = vmul.f32 %v436, %v948
    %v1461 = vmul.f32 %v437, %v949
    %v1462 = vmul.f32 %v438, %v950
    %v1463 = vmul.f32 %v439, %v951
    %v1464 = vmul.f32 %v440, %v952
    %v1465 = vmul.f32 %v441, %v953
    %v1466 = vmul.f32 %v442, %v954
    %v1467 = vmul.f32 %v443, %v955
    %v1468 = vmul.f32 %v444, %v956
    %v1469 = vmul.f32 %v445, %v957
    %v1470 = vmul.f32 %v446, %v958
    %v1471 = vmul.f32 %v447, %v959
    %v1472 = vmul.f32 %v448, %v960
    %v1473 = vmul.f32 %v449, %v961
    %v1474 = vmul.f32 %v450, %v962
    %v1475 = vmul.f32 %v451, %v963
    %v1476 = vmul.f32 %v452, %v964
    %v1477 = vmul.f32 %v453, %v965
    %v1478 = vmul.f32 %v454, %v966
    %v1479 = vmul.f32 %v455, %v967
    %v1480 = vmul.f32 %v456, %v968
    %v1481 = vmul.f32 %v457, %v969
    %v1482 = vmul.f32 %v458, %v970
    %v1483 = vmul.f32 %v459, %v971
    %v1484 = vmul.f32 %v460, %v972
    %v1485 = vmul.f32 %v461, %v973
    %v1486 = vmul.f32 %v462, %v974
    %v1487 = vmul.f32 %v463, %v975
    %v1488 = vmul.f32 %v464, %v976
    %v1489 = vmul.f32 %v465, %v977
    %v1490 = vmul.f32 %v466, %v978
    %v1491 = vmul.f32 %v467, %v979
    %v1492 = vmul.f32 %v468, %v980
    %v1493 = vmul.f32 %v469, %v981
    %v1494 = vmul.f32 %v470, %v982
    %v1495 = vmul.f32 %v471, %v983
    %v1496 = vmul.f32 %v472, %v984
    %v1497 = vmul.f32 %v473, %v985
    %v1498 = vmul.f32 %v474, %v986
    %v1499 = vmul.f32 %v475, %v987
    %v1500 = vmul.f32 %v476, %v988
    %v1501 = vmul.f32 %v477, %v989
    %v1502 = vmul.f32 %v478, %v990
    %v1503 = vmul.f32 %v479, %v991
    %v1504 = vmul.f32 %v480, %v992
    %v1505 = vmul.f32 %v481, %v993
    %v1506 = vmul.f32 %v482, %v994
    %v1507 = vmul.f32 %v483, %v995
    %v1508 = vmul.f32 %v484, %v996
    %v1509 = vmul.f32 %v485, %v997
    %v1510 = vmul.f32 %v486, %v998
    %v1511 = vmul.f32 %v487, %v999
    %v1512 = vmul.f32 %v488, %v1000
    %v1513 = vmul.f32 %v489, %v1001
    %v1514 = vmul.f32 %v490, %v1002
    %v1515 = vmul.f32 %v491, %v1003
    %v1516 = vmul.f32 %v492, %v1004
    %v1517 = vmul.f32 %v493, %v1005
    %v1518 = vmul.f32 %v494, %v1006
    %v1519 = vmul.f32 %v495, %v1007
    %v1520 = vmul.f32 %v496, %v1008
    %v1521 = vmul.f32 %v497, %v1009
    %v1522 = vmul.f32 %v498, %v1010
    %v1523 = vmul.f32 %v499, %v1011
    %v1524 = vmul.f32 %v500, %v1012
    %v1525 = vmul.f32 %v501, %v1013
    %v1526 = vmul.f32 %v502, %v1014
    %v1527 = vmul.f32 %v503, %v1015
    %v1528 = vmul.f32 %v504, %v1016
    %v1529 = vmul.f32 %v505, %v1017
    %v1530 = vmul.f32 %v506, %v1018
    %v1531 = vmul.f32 %v507, %v1019
    %v1532 = vmul.f32 %v508, %v1020
    %v1533 = vmul.f32 %v509, %v1021
    %v1534 = vmul.f32 %v510, %v1022
    %v1535 = vmul.f32 %v511, %v1023
    %v1536 = vmul.f32 %v512, %v1024
    %v1537 = vmul.f32 %v513, %v1025
    %v1538 = vmul.f32 %v514, %v1026
    %v1539 = vmul.f32 %v515, %v1027
    %v1540 = vmul.f32 %v516, %v1028
    %v1541 = vmul.f32 %v517, %v1029
    %v1542 = vmul.f32 %v518, %v1030
    %v1543 = vmul.f32 %v519, %v1031
    %v1544 = vmul.f32 %v520, %v1032
    %v1545 = vmul.f32 %v521, %v1033
    %v1546 = vmul.f32 %v522, %v1034
    %v1547 = vmul.f32 %v523, %v1035
    %v1548 = vmul.f32 %v524, %v1036
    %v1549 = vmul.f32 %v525, %v1037
    %v1550 = vmul.f32 %v526, %v1038
    %v1551 = vmul.f32 %v527, %v1039
    %v1552 = vmul.f32 %v528, %v1040
    %v1553 = vmul.f32 %v529, %v1041
    %v1554 = vmul.f32 %v530, %v1042
    %v1555 = vmul.f32 %v531, %v1043
    %v1556 = vmul.f32 %v532, %v1044
    %v1557 = vmul.f32 %v533, %v1045
    %v1558 = vmul.f32 %v534, %v1046
    %v1559 = vmul.f32 %v535, %v1047
    %v1560 = vmul.f32 %v536, %v1048
    %v1561 = vmul.f32 %v537, %v1049
    %1562 = vst [vmem:[#allocation5] sm:$0xff] %v1050
    %1563 = vst [vmem:[#allocation5 + $0x8] sm:$0xff] %v1051
    %1564 = vst [vmem:[#allocation5 + $0x10] sm:$0xff] %v1052
    %1565 = vst [vmem:[#allocation5 + $0x18] sm:$0xff] %v1053
    %1566 = vst [vmem:[#allocation5 + $0x20] sm:$0xff] %v1054
    %1567 = vst [vmem:[#allocation5 + $0x28] sm:$0xff] %v1055
    %1568 = vst [vmem:[#allocation5 + $0x30] sm:$0xff] %v1056
    %1569 = vst [vmem:[#allocation5 + $0x38] sm:$0xff] %v1057
    %1570 = vst [vmem:[#allocation5 + $0x40] sm:$0xff] %v1058
    %1571 = vst [vmem:[#allocation5 + $0x48] sm:$0xff] %v1059
    %1572 = vst [vmem:[#allocation5 + $0x50] sm:$0xff] %v1060
    %1573 = vst [vmem:[#allocation5 + $0x58] sm:$0xff] %v1061
    %1574 = vst [vmem:[#allocation5 + $0x60] sm:$0xff] %v1062
    %1575 = vst [vmem:[#allocation5 + $0x68] sm:$0xff] %v1063
    %1576 = vst [vmem:[#allocation5 + $0x70] sm:$0xff] %v1064
    %1577 = vst [vmem:[#allocation5 + $0x78] sm:$0xff] %v1065
    %1578 = vst [vmem:[#allocation5 + $0x80] sm:$0xff] %v1066
    %1579 = vst [vmem:[#allocation5 + $0x88] sm:$0xff] %v1067
    %1580 = vst [vmem:[#allocation5 + $0x90] sm:$0xff] %v1068
    %1581 = vst [vmem:[#allocation5 + $0x98] sm:$0xff] %v1069
    %1582 = vst [vmem:[#allocation5 + $0xa0] sm:$0xff] %v1070
    %1583 = vst [vmem:[#allocation5 + $0xa8] sm:$0xff] %v1071
    %1584 = vst [vmem:[#allocation5 + $0xb0] sm:$0xff] %v1072
    %1585 = vst [vmem:[#allocation5 + $0xb8] sm:$0xff] %v1073
    %1586 = vst [vmem:[#allocation5 + $0xc0] sm:$0xff] %v1074
    %1587 = vst [vmem:[#allocation5 + $0xc8] sm:$0xff] %v1075
    %1588 = vst [vmem:[#allocation5 + $0xd0] sm:$0xff] %v1076
    %1589 = vst [vmem:[#allocation5 + $0xd8] sm:$0xff] %v1077
    %1590 = vst [vmem:[#allocation5 + $0xe0] sm:$0xff] %v1078
    %1591 = vst [vmem:[#allocation5 + $0xe8] sm:$0xff] %v1079
    %1592 = vst [vmem:[#allocation5 + $0xf0] sm:$0xff] %v1080
    %1593 = vst [vmem:[#allocation5 + $0xf8] sm:$0xff] %v1081
    %1594 = vst [vmem:[#allocation5 + $0x100] sm:$0xff] %v1082
    %1595 = vst [vmem:[#allocation5 + $0x108] sm:$0xff] %v1083
    %1596 = vst [vmem:[#allocation5 + $0x110] sm:$0xff] %v1084
    %1597 = vst [vmem:[#allocation5 + $0x118] sm:$0xff] %v1085
    %1598 = vst [vmem:[#allocation5 + $0x120] sm:$0xff] %v1086
    %1599 = vst [vmem:[#allocation5 + $0x128] sm:$0xff] %v1087
    %1600 = vst [vmem:[#allocation5 + $0x130] sm:$0xff] %v1088
    %1601 = vst [vmem:[#allocation5 + $0x138] sm:$0xff] %v1089
    %1602 = vst [vmem:[#allocation5 + $0x140] sm:$0xff] %v1090
    %1603 = vst [vmem:[#allocation5 + $0x148] sm:$0xff] %v1091
    %1604 = vst [vmem:[#allocation5 + $0x150] sm:$0xff] %v1092
    %1605 = vst [vmem:[#allocation5 + $0x158] sm:$0xff] %v1093
    %1606 = vst [vmem:[#allocation5 + $0x160] sm:$0xff] %v1094
    %1607 = vst [vmem:[#allocation5 + $0x168] sm:$0xff] %v1095
    %1608 = vst [vmem:[#allocation5 + $0x170] sm:$0xff] %v1096
    %1609 = vst [vmem:[#allocation5 + $0x178] sm:$0xff] %v1097
    %1610 = vst [vmem:[#allocation5 + $0x180] sm:$0xff] %v1098
    %1611 = vst [vmem:[#allocation5 + $0x188] sm:$0xff] %v1099
    %1612 = vst [vmem:[#allocation5 + $0x190] sm:$0xff] %v1100
    %1613 = vst [vmem:[#allocation5 + $0x198] sm:$0xff] %v1101
    %1614 = vst [vmem:[#allocation5 + $0x1a0] sm:$0xff] %v1102
    %1615 = vst [vmem:[#allocation5 + $0x1a8] sm:$0xff] %v1103
    %1616 = vst [vmem:[#allocation5 + $0x1b0] sm:$0xff] %v1104
    %1617 = vst [vmem:[#allocation5 + $0x1b8] sm:$0xff] %v1105
    %1618 = vst [vmem:[#allocation5 + $0x1c0] sm:$0xff] %v1106
    %1619 = vst [vmem:[#allocation5 + $0x1c8] sm:$0xff] %v1107
    %1620 = vst [vmem:[#allocation5 + $0x1d0] sm:$0xff] %v1108
    %1621 = vst [vmem:[#allocation5 + $0x1d8] sm:$0xff] %v1109
    %1622 = vst [vmem:[#allocation5 + $0x1e0] sm:$0xff] %v1110
    %1623 = vst [vmem:[#allocation5 + $0x1e8] sm:$0xff] %v1111
    %1624 = vst [vmem:[#allocation5 + $0x1f0] sm:$0xff] %v1112
    %1625 = vst [vmem:[#allocation5 + $0x1f8] sm:$0xff] %v1113
    %1626 = vst [vmem:[#allocation5 + $0x200] sm:$0xff] %v1114
    %1627 = vst [vmem:[#allocation5 + $0x208] sm:$0xff] %v1115
    %1628 = vst [vmem:[#allocation5 + $0x210] sm:$0xff] %v1116
    %1629 = vst [vmem:[#allocation5 + $0x218] sm:$0xff] %v1117
    %1630 = vst [vmem:[#allocation5 + $0x220] sm:$0xff] %v1118
    %1631 = vst [vmem:[#allocation5 + $0x228] sm:$0xff] %v1119
    %1632 = vst [vmem:[#allocation5 + $0x230] sm:$0xff] %v1120
    %1633 = vst [vmem:[#allocation5 + $0x238] sm:$0xff] %v1121
    %1634 = vst [vmem:[#allocation5 + $0x240] sm:$0xff] %v1122
    %1635 = vst [vmem:[#allocation5 + $0x248] sm:$0xff] %v1123
    %1636 = vst [vmem:[#allocation5 + $0x250] sm:$0xff] %v1124
    %1637 = vst [vmem:[#allocation5 + $0x258] sm:$0xff] %v1125
    %1638 = vst [vmem:[#allocation5 + $0x260] sm:$0xff] %v1126
    %1639 = vst [vmem:[#allocation5 + $0x268] sm:$0xff] %v1127
    %1640 = vst [vmem:[#allocation5 + $0x270] sm:$0xff] %v1128
    %1641 = vst [vmem:[#allocation5 + $0x278] sm:$0xff] %v1129
    %1642 = vst [vmem:[#allocation5 + $0x280] sm:$0xff] %v1130
    %1643 = vst [vmem:[#allocation5 + $0x288] sm:$0xff] %v1131
    %1644 = vst [vmem:[#allocation5 + $0x290] sm:$0xff] %v1132
    %1645 = vst [vmem:[#allocation5 + $0x298] sm:$0xff] %v1133
    %1646 = vst [vmem:[#allocation5 + $0x2a0] sm:$0xff] %v1134
    %1647 = vst [vmem:[#allocation5 + $0x2a8] sm:$0xff] %v1135
    %1648 = vst [vmem:[#allocation5 + $0x2b0] sm:$0xff] %v1136
    %1649 = vst [vmem:[#allocation5 + $0x2b8] sm:$0xff] %v1137
    %1650 = vst [vmem:[#allocation5 + $0x2c0] sm:$0xff] %v1138
    %1651 = vst [vmem:[#allocation5 + $0x2c8] sm:$0xff] %v1139
    %1652 = vst [vmem:[#allocation5 + $0x2d0] sm:$0xff] %v1140
    %1653 = vst [vmem:[#allocation5 + $0x2d8] sm:$0xff] %v1141
    %1654 = vst [vmem:[#allocation5 + $0x2e0] sm:$0xff] %v1142
    %1655 = vst [vmem:[#allocation5 + $0x2e8] sm:$0xff] %v1143
    %1656 = vst [vmem:[#allocation5 + $0x2f0] sm:$0xff] %v1144
    %1657 = vst [vmem:[#allocation5 + $0x2f8] sm:$0xff] %v1145
    %1658 = vst [vmem:[#allocation5 + $0x300] sm:$0xff] %v1146
    %1659 = vst [vmem:[#allocation5 + $0x308] sm:$0xff] %v1147
    %1660 = vst [vmem:[#allocation5 + $0x310] sm:$0xff] %v1148
    %1661 = vst [vmem:[#allocation5 + $0x318] sm:$0xff] %v1149
    %1662 = vst [vmem:[#allocation5 + $0x320] sm:$0xff] %v1150
    %1663 = vst [vmem:[#allocation5 + $0x328] sm:$0xff] %v1151
    %1664 = vst [vmem:[#allocation5 + $0x330] sm:$0xff] %v1152
    %1665 = vst [vmem:[#allocation5 + $0x338] sm:$0xff] %v1153
    %1666 = vst [vmem:[#allocation5 + $0x340] sm:$0xff] %v1154
    %1667 = vst [vmem:[#allocation5 + $0x348] sm:$0xff] %v1155
    %1668 = vst [vmem:[#allocation5 + $0x350] sm:$0xff] %v1156
    %1669 = vst [vmem:[#allocation5 + $0x358] sm:$0xff] %v1157
    %1670 = vst [vmem:[#allocation5 + $0x360] sm:$0xff] %v1158
    %1671 = vst [vmem:[#allocation5 + $0x368] sm:$0xff] %v1159
    %1672 = vst [vmem:[#allocation5 + $0x370] sm:$0xff] %v1160
    %1673 = vst [vmem:[#allocation5 + $0x378] sm:$0xff] %v1161
    %1674 = vst [vmem:[#allocation5 + $0x380] sm:$0xff] %v1162
    %1675 = vst [vmem:[#allocation5 + $0x388] sm:$0xff] %v1163
    %1676 = vst [vmem:[#allocation5 + $0x390] sm:$0xff] %v1164
    %1677 = vst [vmem:[#allocation5 + $0x398] sm:$0xff] %v1165
    %1678 = vst [vmem:[#allocation5 + $0x3a0] sm:$0xff] %v1166
    %1679 = vst [vmem:[#allocation5 + $0x3a8] sm:$0xff] %v1167
    %1680 = vst [vmem:[#allocation5 + $0x3b0] sm:$0xff] %v1168
    %1681 = vst [vmem:[#allocation5 + $0x3b8] sm:$0xff] %v1169
    %1682 = vst [vmem:[#allocation5 + $0x3c0] sm:$0xff] %v1170
    %1683 = vst [vmem:[#allocation5 + $0x3c8] sm:$0xff] %v1171
    %1684 = vst [vmem:[#allocation5 + $0x3d0] sm:$0xff] %v1172
    %1685 = vst [vmem:[#allocation5 + $0x3d8] sm:$0xff] %v1173
    %1686 = vst [vmem:[#allocation5 + $0x3e0] sm:$0xff] %v1174
    %1687 = vst [vmem:[#allocation5 + $0x3e8] sm:$0xff] %v1175
    %1688 = vst [vmem:[#allocation5 + $0x3f0] sm:$0xff] %v1176
    %1689 = vst [vmem:[#allocation5 + $0x3f8] sm:$0xff] %v1177
    %1690 = vst [vmem:[#allocation5 + $0x400] sm:$0xff] %v1178
    %1691 = vst [vmem:[#allocation5 + $0x408] sm:$0xff] %v1179
    %1692 = vst [vmem:[#allocation5 + $0x410] sm:$0xff] %v1180
    %1693 = vst [vmem:[#allocation5 + $0x418] sm:$0xff] %v1181
    %1694 = vst [vmem:[#allocation5 + $0x420] sm:$0xff] %v1182
    %1695 = vst [vmem:[#allocation5 + $0x428] sm:$0xff] %v1183
    %1696 = vst [vmem:[#allocation5 + $0x430] sm:$0xff] %v1184
    %1697 = vst [vmem:[#allocation5 + $0x438] sm:$0xff] %v1185
    %1698 = vst [vmem:[#allocation5 + $0x440] sm:$0xff] %v1186
    %1699 = vst [vmem:[#allocation5 + $0x448] sm:$0xff] %v1187
    %1700 = vst [vmem:[#allocation5 + $0x450] sm:$0xff] %v1188
    %1701 = vst [vmem:[#allocation5 + $0x458] sm:$0xff] %v1189
    %1702 = vst [vmem:[#allocation5 + $0x460] sm:$0xff] %v1190
    %1703 = vst [vmem:[#allocation5 + $0x468] sm:$0xff] %v1191
    %1704 = vst [vmem:[#allocation5 + $0x470] sm:$0xff] %v1192
    %1705 = vst [vmem:[#allocation5 + $0x478] sm:$0xff] %v1193
    %1706 = vst [vmem:[#allocation5 + $0x480] sm:$0xff] %v1194
    %1707 = vst [vmem:[#allocation5 + $0x488] sm:$0xff] %v1195
    %1708 = vst [vmem:[#allocation5 + $0x490] sm:$0xff] %v1196
    %1709 = vst [vmem:[#allocation5 + $0x498] sm:$0xff] %v1197
    %1710 = vst [vmem:[#allocation5 + $0x4a0] sm:$0xff] %v1198
    %1711 = vst [vmem:[#allocation5 + $0x4a8] sm:$0xff] %v1199
    %1712 = vst [vmem:[#allocation5 + $0x4b0] sm:$0xff] %v1200
    %1713 = vst [vmem:[#allocation5 + $0x4b8] sm:$0xff] %v1201
    %1714 = vst [vmem:[#allocation5 + $0x4c0] sm:$0xff] %v1202
    %1715 = vst [vmem:[#allocation5 + $0x4c8] sm:$0xff] %v1203
    %1716 = vst [vmem:[#allocation5 + $0x4d0] sm:$0xff] %v1204
    %1717 = vst [vmem:[#allocation5 + $0x4d8] sm:$0xff] %v1205
    %1718 = vst [vmem:[#allocation5 + $0x4e0] sm:$0xff] %v1206
    %1719 = vst [vmem:[#allocation5 + $0x4e8] sm:$0xff] %v1207
    %1720 = vst [vmem:[#allocation5 + $0x4f0] sm:$0xff] %v1208
    %1721 = vst [vmem:[#allocation5 + $0x4f8] sm:$0xff] %v1209
    %1722 = vst [vmem:[#allocation5 + $0x500] sm:$0xff] %v1210
    %1723 = vst [vmem:[#allocation5 + $0x508] sm:$0xff] %v1211
    %1724 = vst [vmem:[#allocation5 + $0x510] sm:$0xff] %v1212
    %1725 = vst [vmem:[#allocation5 + $0x518] sm:$0xff] %v1213
    %1726 = vst [vmem:[#allocation5 + $0x520] sm:$0xff] %v1214
    %1727 = vst [vmem:[#allocation5 + $0x528] sm:$0xff] %v1215
    %1728 = vst [vmem:[#allocation5 + $0x530] sm:$0xff] %v1216
    %1729 = vst [vmem:[#allocation5 + $0x538] sm:$0xff] %v1217
    %1730 = vst [vmem:[#allocation5 + $0x540] sm:$0xff] %v1218
    %1731 = vst [vmem:[#allocation5 + $0x548] sm:$0xff] %v1219
    %1732 = vst [vmem:[#allocation5 + $0x550] sm:$0xff] %v1220
    %1733 = vst [vmem:[#allocation5 + $0x558] sm:$0xff] %v1221
    %1734 = vst [vmem:[#allocation5 + $0x560] sm:$0xff] %v1222
    %1735 = vst [vmem:[#allocation5 + $0x568] sm:$0xff] %v1223
    %1736 = vst [vmem:[#allocation5 + $0x570] sm:$0xff] %v1224
    %1737 = vst [vmem:[#allocation5 + $0x578] sm:$0xff] %v1225
    %1738 = vst [vmem:[#allocation5 + $0x580] sm:$0xff] %v1226
    %1739 = vst [vmem:[#allocation5 + $0x588] sm:$0xff] %v1227
    %1740 = vst [vmem:[#allocation5 + $0x590] sm:$0xff] %v1228
    %1741 = vst [vmem:[#allocation5 + $0x598] sm:$0xff] %v1229
    %1742 = vst [vmem:[#allocation5 + $0x5a0] sm:$0xff] %v1230
    %1743 = vst [vmem:[#allocation5 + $0x5a8] sm:$0xff] %v1231
    %1744 = vst [vmem:[#allocation5 + $0x5b0] sm:$0xff] %v1232
    %1745 = vst [vmem:[#allocation5 + $0x5b8] sm:$0xff] %v1233
    %1746 = vst [vmem:[#allocation5 + $0x5c0] sm:$0xff] %v1234
    %1747 = vst [vmem:[#allocation5 + $0x5c8] sm:$0xff] %v1235
    %1748 = vst [vmem:[#allocation5 + $0x5d0] sm:$0xff] %v1236
    %1749 = vst [vmem:[#allocation5 + $0x5d8] sm:$0xff] %v1237
    %1750 = vst [vmem:[#allocation5 + $0x5e0] sm:$0xff] %v1238
    %1751 = vst [vmem:[#allocation5 + $0x5e8] sm:$0xff] %v1239
    %1752 = vst [vmem:[#allocation5 + $0x5f0] sm:$0xff] %v1240
    %1753 = vst [vmem:[#allocation5 + $0x5f8] sm:$0xff] %v1241
    %1754 = vst [vmem:[#allocation5 + $0x600] sm:$0xff] %v1242
    %1755 = vst [vmem:[#allocation5 + $0x608] sm:$0xff] %v1243
    %1756 = vst [vmem:[#allocation5 + $0x610] sm:$0xff] %v1244
    %1757 = vst [vmem:[#allocation5 + $0x618] sm:$0xff] %v1245
    %1758 = vst [vmem:[#allocation5 + $0x620] sm:$0xff] %v1246
    %1759 = vst [vmem:[#allocation5 + $0x628] sm:$0xff] %v1247
    %1760 = vst [vmem:[#allocation5 + $0x630] sm:$0xff] %v1248
    %1761 = vst [vmem:[#allocation5 + $0x638] sm:$0xff] %v1249
    %1762 = vst [vmem:[#allocation5 + $0x640] sm:$0xff] %v1250
    %1763 = vst [vmem:[#allocation5 + $0x648] sm:$0xff] %v1251
    %1764 = vst [vmem:[#allocation5 + $0x650] sm:$0xff] %v1252
    %1765 = vst [vmem:[#allocation5 + $0x658] sm:$0xff] %v1253
    %1766 = vst [vmem:[#allocation5 + $0x660] sm:$0xff] %v1254
    %1767 = vst [vmem:[#allocation5 + $0x668] sm:$0xff] %v1255
    %1768 = vst [vmem:[#allocation5 + $0x670] sm:$0xff] %v1256
    %1769 = vst [vmem:[#allocation5 + $0x678] sm:$0xff] %v1257
    %1770 = vst [vmem:[#allocation5 + $0x680] sm:$0xff] %v1258
    %1771 = vst [vmem:[#allocation5 + $0x688] sm:$0xff] %v1259
    %1772 = vst [vmem:[#allocation5 + $0x690] sm:$0xff] %v1260
    %1773 = vst [vmem:[#allocation5 + $0x698] sm:$0xff] %v1261
    %1774 = vst [vmem:[#allocation5 + $0x6a0] sm:$0xff] %v1262
    %1775 = vst [vmem:[#allocation5 + $0x6a8] sm:$0xff] %v1263
    %1776 = vst [vmem:[#allocation5 + $0x6b0] sm:$0xff] %v1264
    %1777 = vst [vmem:[#allocation5 + $0x6b8] sm:$0xff] %v1265
    %1778 = vst [vmem:[#allocation5 + $0x6c0] sm:$0xff] %v1266
    %1779 = vst [vmem:[#allocation5 + $0x6c8] sm:$0xff] %v1267
    %1780 = vst [vmem:[#allocation5 + $0x6d0] sm:$0xff] %v1268
    %1781 = vst [vmem:[#allocation5 + $0x6d8] sm:$0xff] %v1269
    %1782 = vst [vmem:[#allocation5 + $0x6e0] sm:$0xff] %v1270
    %1783 = vst [vmem:[#allocation5 + $0x6e8] sm:$0xff] %v1271
    %1784 = vst [vmem:[#allocation5 + $0x6f0] sm:$0xff] %v1272
    %1785 = vst [vmem:[#allocation5 + $0x6f8] sm:$0xff] %v1273
    %1786 = vst [vmem:[#allocation5 + $0x700] sm:$0xff] %v1274
    %1787 = vst [vmem:[#allocation5 + $0x708] sm:$0xff] %v1275
    %1788 = vst [vmem:[#allocation5 + $0x710] sm:$0xff] %v1276
    %1789 = vst [vmem:[#allocation5 + $0x718] sm:$0xff] %v1277
    %1790 = vst [vmem:[#allocation5 + $0x720] sm:$0xff] %v1278
    %1791 = vst [vmem:[#allocation5 + $0x728] sm:$0xff] %v1279
    %1792 = vst [vmem:[#allocation5 + $0x730] sm:$0xff] %v1280
    %1793 = vst [vmem:[#allocation5 + $0x738] sm:$0xff] %v1281
    %1794 = vst [vmem:[#allocation5 + $0x740] sm:$0xff] %v1282
    %1795 = vst [vmem:[#allocation5 + $0x748] sm:$0xff] %v1283
    %1796 = vst [vmem:[#allocation5 + $0x750] sm:$0xff] %v1284
    %1797 = vst [vmem:[#allocation5 + $0x758] sm:$0xff] %v1285
    %1798 = vst [vmem:[#allocation5 + $0x760] sm:$0xff] %v1286
    %1799 = vst [vmem:[#allocation5 + $0x768] sm:$0xff] %v1287
    %1800 = vst [vmem:[#allocation5 + $0x770] sm:$0xff] %v1288
    %1801 = vst [vmem:[#allocation5 + $0x778] sm:$0xff] %v1289
    %1802 = vst [vmem:[#allocation5 + $0x780] sm:$0xff] %v1290
    %1803 = vst [vmem:[#allocation5 + $0x788] sm:$0xff] %v1291
    %1804 = vst [vmem:[#allocation5 + $0x790] sm:$0xff] %v1292
    %1805 = vst [vmem:[#allocation5 + $0x798] sm:$0xff] %v1293
    %1806 = vst [vmem:[#allocation5 + $0x7a0] sm:$0xff] %v1294
    %1807 = vst [vmem:[#allocation5 + $0x7a8] sm:$0xff] %v1295
    %1808 = vst [vmem:[#allocation5 + $0x7b0] sm:$0xff] %v1296
    %1809 = vst [vmem:[#allocation5 + $0x7b8] sm:$0xff] %v1297
    %1810 = vst [vmem:[#allocation5 + $0x7c0] sm:$0xff] %v1298
    %1811 = vst [vmem:[#allocation5 + $0x7c8] sm:$0xff] %v1299
    %1812 = vst [vmem:[#allocation5 + $0x7d0] sm:$0xff] %v1300
    %1813 = vst [vmem:[#allocation5 + $0x7d8] sm:$0xff] %v1301
    %1814 = vst [vmem:[#allocation5 + $0x7e0] sm:$0xff] %v1302
    %1815 = vst [vmem:[#allocation5 + $0x7e8] sm:$0xff] %v1303
    %1816 = vst [vmem:[#allocation5 + $0x7f0] sm:$0xff] %v1304
    %1817 = vst [vmem:[#allocation5 + $0x7f8] sm:$0xff] %v1305
    %1818 = vst [vmem:[#allocation5 + $0x800] sm:$0xff] %v1306
    %1819 = vst [vmem:[#allocation5 + $0x808] sm:$0xff] %v1307
    %1820 = vst [vmem:[#allocation5 + $0x810] sm:$0xff] %v1308
    %1821 = vst [vmem:[#allocation5 + $0x818] sm:$0xff] %v1309
    %1822 = vst [vmem:[#allocation5 + $0x820] sm:$0xff] %v1310
    %1823 = vst [vmem:[#allocation5 + $0x828] sm:$0xff] %v1311
    %1824 = vst [vmem:[#allocation5 + $0x830] sm:$0xff] %v1312
    %1825 = vst [vmem:[#allocation5 + $0x838] sm:$0xff] %v1313
    %1826 = vst [vmem:[#allocation5 + $0x840] sm:$0xff] %v1314
    %1827 = vst [vmem:[#allocation5 + $0x848] sm:$0xff] %v1315
    %1828 = vst [vmem:[#allocation5 + $0x850] sm:$0xff] %v1316
    %1829 = vst [vmem:[#allocation5 + $0x858] sm:$0xff] %v1317
    %1830 = vst [vmem:[#allocation5 + $0x860] sm:$0xff] %v1318
    %1831 = vst [vmem:[#allocation5 + $0x868] sm:$0xff] %v1319
    %1832 = vst [vmem:[#allocation5 + $0x870] sm:$0xff] %v1320
    %1833 = vst [vmem:[#allocation5 + $0x878] sm:$0xff] %v1321
    %1834 = vst [vmem:[#allocation5 + $0x880] sm:$0xff] %v1322
    %1835 = vst [vmem:[#allocation5 + $0x888] sm:$0xff] %v1323
    %1836 = vst [vmem:[#allocation5 + $0x890] sm:$0xff] %v1324
    %1837 = vst [vmem:[#allocation5 + $0x898] sm:$0xff] %v1325
    %1838 = vst [vmem:[#allocation5 + $0x8a0] sm:$0xff] %v1326
    %1839 = vst [vmem:[#allocation5 + $0x8a8] sm:$0xff] %v1327
    %1840 = vst [vmem:[#allocation5 + $0x8b0] sm:$0xff] %v1328
    %1841 = vst [vmem:[#allocation5 + $0x8b8] sm:$0xff] %v1329
    %1842 = vst [vmem:[#allocation5 + $0x8c0] sm:$0xff] %v1330
    %1843 = vst [vmem:[#allocation5 + $0x8c8] sm:$0xff] %v1331
    %1844 = vst [vmem:[#allocation5 + $0x8d0] sm:$0xff] %v1332
    %1845 = vst [vmem:[#allocation5 + $0x8d8] sm:$0xff] %v1333
    %1846 = vst [vmem:[#allocation5 + $0x8e0] sm:$0xff] %v1334
    %1847 = vst [vmem:[#allocation5 + $0x8e8] sm:$0xff] %v1335
    %1848 = vst [vmem:[#allocation5 + $0x8f0] sm:$0xff] %v1336
    %1849 = vst [vmem:[#allocation5 + $0x8f8] sm:$0xff] %v1337
    %1850 = vst [vmem:[#allocation5 + $0x900] sm:$0xff] %v1338
    %1851 = vst [vmem:[#allocation5 + $0x908] sm:$0xff] %v1339
    %1852 = vst [vmem:[#allocation5 + $0x910] sm:$0xff] %v1340
    %1853 = vst [vmem:[#allocation5 + $0x918] sm:$0xff] %v1341
    %1854 = vst [vmem:[#allocation5 + $0x920] sm:$0xff] %v1342
    %1855 = vst [vmem:[#allocation5 + $0x928] sm:$0xff] %v1343
    %1856 = vst [vmem:[#allocation5 + $0x930] sm:$0xff] %v1344
    %1857 = vst [vmem:[#allocation5 + $0x938] sm:$0xff] %v1345
    %1858 = vst [vmem:[#allocation5 + $0x940] sm:$0xff] %v1346
    %1859 = vst [vmem:[#allocation5 + $0x948] sm:$0xff] %v1347
    %1860 = vst [vmem:[#allocation5 + $0x950] sm:$0xff] %v1348
    %1861 = vst [vmem:[#allocation5 + $0x958] sm:$0xff] %v1349
    %1862 = vst [vmem:[#allocation5 + $0x960] sm:$0xff] %v1350
    %1863 = vst [vmem:[#allocation5 + $0x968] sm:$0xff] %v1351
    %1864 = vst [vmem:[#allocation5 + $0x970] sm:$0xff] %v1352
    %1865 = vst [vmem:[#allocation5 + $0x978] sm:$0xff] %v1353
    %1866 = vst [vmem:[#allocation5 + $0x980] sm:$0xff] %v1354
    %1867 = vst [vmem:[#allocation5 + $0x988] sm:$0xff] %v1355
    %1868 = vst [vmem:[#allocation5 + $0x990] sm:$0xff] %v1356
    %1869 = vst [vmem:[#allocation5 + $0x998] sm:$0xff] %v1357
    %1870 = vst [vmem:[#allocation5 + $0x9a0] sm:$0xff] %v1358
    %1871 = vst [vmem:[#allocation5 + $0x9a8] sm:$0xff] %v1359
    %1872 = vst [vmem:[#allocation5 + $0x9b0] sm:$0xff] %v1360
    %1873 = vst [vmem:[#allocation5 + $0x9b8] sm:$0xff] %v1361
    %1874 = vst [vmem:[#allocation5 + $0x9c0] sm:$0xff] %v1362
    %1875 = vst [vmem:[#allocation5 + $0x9c8] sm:$0xff] %v1363
    %1876 = vst [vmem:[#allocation5 + $0x9d0] sm:$0xff] %v1364
    %1877 = vst [vmem:[#allocation5 + $0x9d8] sm:$0xff] %v1365
    %1878 = vst [vmem:[#allocation5 + $0x9e0] sm:$0xff] %v1366
    %1879 = vst [vmem:[#allocation5 + $0x9e8] sm:$0xff] %v1367
    %1880 = vst [vmem:[#allocation5 + $0x9f0] sm:$0xff] %v1368
    %1881 = vst [vmem:[#allocation5 + $0x9f8] sm:$0xff] %v1369
    %1882 = vst [vmem:[#allocation5 + $0xa00] sm:$0xff] %v1370
    %1883 = vst [vmem:[#allocation5 + $0xa08] sm:$0xff] %v1371
    %1884 = vst [vmem:[#allocation5 + $0xa10] sm:$0xff] %v1372
    %1885 = vst [vmem:[#allocation5 + $0xa18] sm:$0xff] %v1373
    %1886 = vst [vmem:[#allocation5 + $0xa20] sm:$0xff] %v1374
    %1887 = vst [vmem:[#allocation5 + $0xa28] sm:$0xff] %v1375
    %1888 = vst [vmem:[#allocation5 + $0xa30] sm:$0xff] %v1376
    %1889 = vst [vmem:[#allocation5 + $0xa38] sm:$0xff] %v1377
    %1890 = vst [vmem:[#allocation5 + $0xa40] sm:$0xff] %v1378
    %1891 = vst [vmem:[#allocation5 + $0xa48] sm:$0xff] %v1379
    %1892 = vst [vmem:[#allocation5 + $0xa50] sm:$0xff] %v1380
    %1893 = vst [vmem:[#allocation5 + $0xa58] sm:$0xff] %v1381
    %1894 = vst [vmem:[#allocation5 + $0xa60] sm:$0xff] %v1382
    %1895 = vst [vmem:[#allocation5 + $0xa68] sm:$0xff] %v1383
    %1896 = vst [vmem:[#allocation5 + $0xa70] sm:$0xff] %v1384
    %1897 = vst [vmem:[#allocation5 + $0xa78] sm:$0xff] %v1385
    %1898 = vst [vmem:[#allocation5 + $0xa80] sm:$0xff] %v1386
    %1899 = vst [vmem:[#allocation5 + $0xa88] sm:$0xff] %v1387
    %1900 = vst [vmem:[#allocation5 + $0xa90] sm:$0xff] %v1388
    %1901 = vst [vmem:[#allocation5 + $0xa98] sm:$0xff] %v1389
    %1902 = vst [vmem:[#allocation5 + $0xaa0] sm:$0xff] %v1390
    %1903 = vst [vmem:[#allocation5 + $0xaa8] sm:$0xff] %v1391
    %1904 = vst [vmem:[#allocation5 + $0xab0] sm:$0xff] %v1392
    %1905 = vst [vmem:[#allocation5 + $0xab8] sm:$0xff] %v1393
    %1906 = vst [vmem:[#allocation5 + $0xac0] sm:$0xff] %v1394
    %1907 = vst [vmem:[#allocation5 + $0xac8] sm:$0xff] %v1395
    %1908 = vst [vmem:[#allocation5 + $0xad0] sm:$0xff] %v1396
    %1909 = vst [vmem:[#allocation5 + $0xad8] sm:$0xff] %v1397
    %1910 = vst [vmem:[#allocation5 + $0xae0] sm:$0xff] %v1398
    %1911 = vst [vmem:[#allocation5 + $0xae8] sm:$0xff] %v1399
    %1912 = vst [vmem:[#allocation5 + $0xaf0] sm:$0xff] %v1400
    %1913 = vst [vmem:[#allocation5 + $0xaf8] sm:$0xff] %v1401
    %1914 = vst [vmem:[#allocation5 + $0xb00] sm:$0xff] %v1402
    %1915 = vst [vmem:[#allocation5 + $0xb08] sm:$0xff] %v1403
    %1916 = vst [vmem:[#allocation5 + $0xb10] sm:$0xff] %v1404
    %1917 = vst [vmem:[#allocation5 + $0xb18] sm:$0xff] %v1405
    %1918 = vst [vmem:[#allocation5 + $0xb20] sm:$0xff] %v1406
    %1919 = vst [vmem:[#allocation5 + $0xb28] sm:$0xff] %v1407
    %1920 = vst [vmem:[#allocation5 + $0xb30] sm:$0xff] %v1408
    %1921 = vst [vmem:[#allocation5 + $0xb38] sm:$0xff] %v1409
    %1922 = vst [vmem:[#allocation5 + $0xb40] sm:$0xff] %v1410
    %1923 = vst [vmem:[#allocation5 + $0xb48] sm:$0xff] %v1411
    %1924 = vst [vmem:[#allocation5 + $0xb50] sm:$0xff] %v1412
    %1925 = vst [vmem:[#allocation5 + $0xb58] sm:$0xff] %v1413
    %1926 = vst [vmem:[#allocation5 + $0xb60] sm:$0xff] %v1414
    %1927 = vst [vmem:[#allocation5 + $0xb68] sm:$0xff] %v1415
    %1928 = vst [vmem:[#allocation5 + $0xb70] sm:$0xff] %v1416
    %1929 = vst [vmem:[#allocation5 + $0xb78] sm:$0xff] %v1417
    %1930 = vst [vmem:[#allocation5 + $0xb80] sm:$0xff] %v1418
    %1931 = vst [vmem:[#allocation5 + $0xb88] sm:$0xff] %v1419
    %1932 = vst [vmem:[#allocation5 + $0xb90] sm:$0xff] %v1420
    %1933 = vst [vmem:[#allocation5 + $0xb98] sm:$0xff] %v1421
    %1934 = vst [vmem:[#allocation5 + $0xba0] sm:$0xff] %v1422
    %1935 = vst [vmem:[#allocation5 + $0xba8] sm:$0xff] %v1423
    %1936 = vst [vmem:[#allocation5 + $0xbb0] sm:$0xff] %v1424
    %1937 = vst [vmem:[#allocation5 + $0xbb8] sm:$0xff] %v1425
    %1938 = vst [vmem:[#allocation5 + $0xbc0] sm:$0xff] %v1426
    %1939 = vst [vmem:[#allocation5 + $0xbc8] sm:$0xff] %v1427
    %1940 = vst [vmem:[#allocation5 + $0xbd0] sm:$0xff] %v1428
    %1941 = vst [vmem:[#allocation5 + $0xbd8] sm:$0xff] %v1429
    %1942 = vst [vmem:[#allocation5 + $0xbe0] sm:$0xff] %v1430
    %1943 = vst [vmem:[#allocation5 + $0xbe8] sm:$0xff] %v1431
    %1944 = vst [vmem:[#allocation5 + $0xbf0] sm:$0xff] %v1432
    %1945 = vst [vmem:[#allocation5 + $0xbf8] sm:$0xff] %v1433
    %1946 = vst [vmem:[#allocation5 + $0xc00] sm:$0xff] %v1434
    %1947 = vst [vmem:[#allocation5 + $0xc08] sm:$0xff] %v1435
    %1948 = vst [vmem:[#allocation5 + $0xc10] sm:$0xff] %v1436
    %1949 = vst [vmem:[#allocation5 + $0xc18] sm:$0xff] %v1437
    %1950 = vst [vmem:[#allocation5 + $0xc20] sm:$0xff] %v1438
    %1951 = vst [vmem:[#allocation5 + $0xc28] sm:$0xff] %v1439
    %1952 = vst [vmem:[#allocation5 + $0xc30] sm:$0xff] %v1440
    %1953 = vst [vmem:[#allocation5 + $0xc38] sm:$0xff] %v1441
    %1954 = vst [vmem:[#allocation5 + $0xc40] sm:$0xff] %v1442
    %1955 = vst [vmem:[#allocation5 + $0xc48] sm:$0xff] %v1443
    %1956 = vst [vmem:[#allocation5 + $0xc50] sm:$0xff] %v1444
    %1957 = vst [vmem:[#allocation5 + $0xc58] sm:$0xff] %v1445
    %1958 = vst [vmem:[#allocation5 + $0xc60] sm:$0xff] %v1446
    %1959 = vst [vmem:[#allocation5 + $0xc68] sm:$0xff] %v1447
    %1960 = vst [vmem:[#allocation5 + $0xc70] sm:$0xff] %v1448
    %1961 = vst [vmem:[#allocation5 + $0xc78] sm:$0xff] %v1449
    %1962 = vst [vmem:[#allocation5 + $0xc80] sm:$0xff] %v1450
    %1963 = vst [vmem:[#allocation5 + $0xc88] sm:$0xff] %v1451
    %1964 = vst [vmem:[#allocation5 + $0xc90] sm:$0xff] %v1452
    %1965 = vst [vmem:[#allocation5 + $0xc98] sm:$0xff] %v1453
    %1966 = vst [vmem:[#allocation5 + $0xca0] sm:$0xff] %v1454
    %1967 = vst [vmem:[#allocation5 + $0xca8] sm:$0xff] %v1455
    %1968 = vst [vmem:[#allocation5 + $0xcb0] sm:$0xff] %v1456
    %1969 = vst [vmem:[#allocation5 + $0xcb8] sm:$0xff] %v1457
    %1970 = vst [vmem:[#allocation5 + $0xcc0] sm:$0xff] %v1458
    %1971 = vst [vmem:[#allocation5 + $0xcc8] sm:$0xff] %v1459
    %1972 = vst [vmem:[#allocation5 + $0xcd0] sm:$0xff] %v1460
    %1973 = vst [vmem:[#allocation5 + $0xcd8] sm:$0xff] %v1461
    %1974 = vst [vmem:[#allocation5 + $0xce0] sm:$0xff] %v1462
    %1975 = vst [vmem:[#allocation5 + $0xce8] sm:$0xff] %v1463
    %1976 = vst [vmem:[#allocation5 + $0xcf0] sm:$0xff] %v1464
    %1977 = vst [vmem:[#allocation5 + $0xcf8] sm:$0xff] %v1465
    %1978 = vst [vmem:[#allocation5 + $0xd00] sm:$0xff] %v1466
    %1979 = vst [vmem:[#allocation5 + $0xd08] sm:$0xff] %v1467
    %1980 = vst [vmem:[#allocation5 + $0xd10] sm:$0xff] %v1468
    %1981 = vst [vmem:[#allocation5 + $0xd18] sm:$0xff] %v1469
    %1982 = vst [vmem:[#allocation5 + $0xd20] sm:$0xff] %v1470
    %1983 = vst [vmem:[#allocation5 + $0xd28] sm:$0xff] %v1471
    %1984 = vst [vmem:[#allocation5 + $0xd30] sm:$0xff] %v1472
    %1985 = vst [vmem:[#allocation5 + $0xd38] sm:$0xff] %v1473
    %1986 = vst [vmem:[#allocation5 + $0xd40] sm:$0xff] %v1474
    %1987 = vst [vmem:[#allocation5 + $0xd48] sm:$0xff] %v1475
    %1988 = vst [vmem:[#allocation5 + $0xd50] sm:$0xff] %v1476
    %1989 = vst [vmem:[#allocation5 + $0xd58] sm:$0xff] %v1477
    %1990 = vst [vmem:[#allocation5 + $0xd60] sm:$0xff] %v1478
    %1991 = vst [vmem:[#allocation5 + $0xd68] sm:$0xff] %v1479
    %1992 = vst [vmem:[#allocation5 + $0xd70] sm:$0xff] %v1480
    %1993 = vst [vmem:[#allocation5 + $0xd78] sm:$0xff] %v1481
    %1994 = vst [vmem:[#allocation5 + $0xd80] sm:$0xff] %v1482
    %1995 = vst [vmem:[#allocation5 + $0xd88] sm:$0xff] %v1483
    %1996 = vst [vmem:[#allocation5 + $0xd90] sm:$0xff] %v1484
    %1997 = vst [vmem:[#allocation5 + $0xd98] sm:$0xff] %v1485
    %1998 = vst [vmem:[#allocation5 + $0xda0] sm:$0xff] %v1486
    %1999 = vst [vmem:[#allocation5 + $0xda8] sm:$0xff] %v1487
    %2000 = vst [vmem:[#allocation5 + $0xdb0] sm:$0xff] %v1488
    %2001 = vst [vmem:[#allocation5 + $0xdb8] sm:$0xff] %v1489
    %2002 = vst [vmem:[#allocation5 + $0xdc0] sm:$0xff] %v1490
    %2003 = vst [vmem:[#allocation5 + $0xdc8] sm:$0xff] %v1491
    %2004 = vst [vmem:[#allocation5 + $0xdd0] sm:$0xff] %v1492
    %2005 = vst [vmem:[#allocation5 + $0xdd8] sm:$0xff] %v1493
    %2006 = vst [vmem:[#allocation5 + $0xde0] sm:$0xff] %v1494
    %2007 = vst [vmem:[#allocation5 + $0xde8] sm:$0xff] %v1495
    %2008 = vst [vmem:[#allocation5 + $0xdf0] sm:$0xff] %v1496
    %2009 = vst [vmem:[#allocation5 + $0xdf8] sm:$0xff] %v1497
    %2010 = vst [vmem:[#allocation5 + $0xe00] sm:$0xff] %v1498
    %2011 = vst [vmem:[#allocation5 + $0xe08] sm:$0xff] %v1499
    %2012 = vst [vmem:[#allocation5 + $0xe10] sm:$0xff] %v1500
    %2013 = vst [vmem:[#allocation5 + $0xe18] sm:$0xff] %v1501
    %2014 = vst [vmem:[#allocation5 + $0xe20] sm:$0xff] %v1502
    %2015 = vst [vmem:[#allocation5 + $0xe28] sm:$0xff] %v1503
    %2016 = vst [vmem:[#allocation5 + $0xe30] sm:$0xff] %v1504
    %2017 = vst [vmem:[#allocation5 + $0xe38] sm:$0xff] %v1505
    %2018 = vst [vmem:[#allocation5 + $0xe40] sm:$0xff] %v1506
    %2019 = vst [vmem:[#allocation5 + $0xe48] sm:$0xff] %v1507
    %2020 = vst [vmem:[#allocation5 + $0xe50] sm:$0xff] %v1508
    %2021 = vst [vmem:[#allocation5 + $0xe58] sm:$0xff] %v1509
    %2022 = vst [vmem:[#allocation5 + $0xe60] sm:$0xff] %v1510
    %2023 = vst [vmem:[#allocation5 + $0xe68] sm:$0xff] %v1511
    %2024 = vst [vmem:[#allocation5 + $0xe70] sm:$0xff] %v1512
    %2025 = vst [vmem:[#allocation5 + $0xe78] sm:$0xff] %v1513
    %2026 = vst [vmem:[#allocation5 + $0xe80] sm:$0xff] %v1514
    %2027 = vst [vmem:[#allocation5 + $0xe88] sm:$0xff] %v1515
    %2028 = vst [vmem:[#allocation5 + $0xe90] sm:$0xff] %v1516
    %2029 = vst [vmem:[#allocation5 + $0xe98] sm:$0xff] %v1517
    %2030 = vst [vmem:[#allocation5 + $0xea0] sm:$0xff] %v1518
    %2031 = vst [vmem:[#allocation5 + $0xea8] sm:$0xff] %v1519
    %2032 = vst [vmem:[#allocation5 + $0xeb0] sm:$0xff] %v1520
    %2033 = vst [vmem:[#allocation5 + $0xeb8] sm:$0xff] %v1521
    %2034 = vst [vmem:[#allocation5 + $0xec0] sm:$0xff] %v1522
    %2035 = vst [vmem:[#allocation5 + $0xec8] sm:$0xff] %v1523
    %2036 = vst [vmem:[#allocation5 + $0xed0] sm:$0xff] %v1524
    %2037 = vst [vmem:[#allocation5 + $0xed8] sm:$0xff] %v1525
    %2038 = vst [vmem:[#allocation5 + $0xee0] sm:$0xff] %v1526
    %2039 = vst [vmem:[#allocation5 + $0xee8] sm:$0xff] %v1527
    %2040 = vst [vmem:[#allocation5 + $0xef0] sm:$0xff] %v1528
    %2041 = vst [vmem:[#allocation5 + $0xef8] sm:$0xff] %v1529
    %2042 = vst [vmem:[#allocation5 + $0xf00] sm:$0xff] %v1530
    %2043 = vst [vmem:[#allocation5 + $0xf08] sm:$0xff] %v1531
    %2044 = vst [vmem:[#allocation5 + $0xf10] sm:$0xff] %v1532
    %2045 = vst [vmem:[#allocation5 + $0xf18] sm:$0xff] %v1533
    %2046 = vst [vmem:[#allocation5 + $0xf20] sm:$0xff] %v1534
    %2047 = vst [vmem:[#allocation5 + $0xf28] sm:$0xff] %v1535
    %2048 = vst [vmem:[#allocation5 + $0xf30] sm:$0xff] %v1536
    %2049 = vst [vmem:[#allocation5 + $0xf38] sm:$0xff] %v1537
    %2050 = vst [vmem:[#allocation5 + $0xf40] sm:$0xff] %v1538
    %2051 = vst [vmem:[#allocation5 + $0xf48] sm:$0xff] %v1539
    %2052 = vst [vmem:[#allocation5 + $0xf50] sm:$0xff] %v1540
    %2053 = vst [vmem:[#allocation5 + $0xf58] sm:$0xff] %v1541
    %2054 = vst [vmem:[#allocation5 + $0xf60] sm:$0xff] %v1542
    %2055 = vst [vmem:[#allocation5 + $0xf68] sm:$0xff] %v1543
    %2056 = vst [vmem:[#allocation5 + $0xf70] sm:$0xff] %v1544
    %2057 = vst [vmem:[#allocation5 + $0xf78] sm:$0xff] %v1545
    %2058 = vst [vmem:[#allocation5 + $0xf80] sm:$0xff] %v1546
    %2059 = vst [vmem:[#allocation5 + $0xf88] sm:$0xff] %v1547
    %2060 = vst [vmem:[#allocation5 + $0xf90] sm:$0xff] %v1548
    %2061 = vst [vmem:[#allocation5 + $0xf98] sm:$0xff] %v1549
    %2062 = vst [vmem:[#allocation5 + $0xfa0] sm:$0xff] %v1550
    %2063 = vst [vmem:[#allocation5 + $0xfa8] sm:$0xff] %v1551
    %2064 = vst [vmem:[#allocation5 + $0xfb0] sm:$0xff] %v1552
    %2065 = vst [vmem:[#allocation5 + $0xfb8] sm:$0xff] %v1553
    %2066 = vst [vmem:[#allocation5 + $0xfc0] sm:$0xff] %v1554
    %2067 = vst [vmem:[#allocation5 + $0xfc8] sm:$0xff] %v1555
    %2068 = vst [vmem:[#allocation5 + $0xfd0] sm:$0xff] %v1556
    %2069 = vst [vmem:[#allocation5 + $0xfd8] sm:$0xff] %v1557
    %2070 = vst [vmem:[#allocation5 + $0xfe0] sm:$0xff] %v1558
    %2071 = vst [vmem:[#allocation5 + $0xfe8] sm:$0xff] %v1559
    %2072 = vst [vmem:[#allocation5 + $0xff0] sm:$0xff] %v1560
    %2073 = vst [vmem:[#allocation5 + $0xff8] sm:$0xff] %v1561
    // Predicated region
    $region14: #{tpu_custom_call.1} parent=1 // pred_check
      _
    $region15: #{tpu_custom_call.1} parent=1 // pred_check_branch
      %2075 = sbr.rel (0) target = $region17
    $region16: #{tpu_custom_call.1} parent=1 // pred_region
      %s2077 = ssub.s32 65536, 65536
      %2078 = vsyncadd [#allocation4], %s2077
      %s2079 = sshll.u32 [#allocation5], 4
      %s2080 = int_to_ptr.vmem [resolvable:$true] %s2079
      %2085 = dma.vmem_to_hbm [thread:$0]  %s2080, 65536, %s2, [#allocation4], 256, 256, 16
    $region17: #{tpu_custom_call.1} parent=1 // pred_fallthru
      _
    // Predicated region
    $region18: #{tpu_custom_call.1} parent=1 // pred_check
      _
    $region19: #{tpu_custom_call.1} parent=1 // pred_check_branch
      %2087 = sbr.rel (0) target = $region21
    $region20: #{tpu_custom_call.1} parent=1 // pred_region
      %2088 = dma.done [#allocation4], 65536
    $region21: #{tpu_custom_call.1} parent=1 // pred_fallthru
      _
    %2089 = vsyncpa [#allocation3], 1
    %2090 = vsyncpa [#allocation4], 1

</llo_original>
